<compile_context>
chip_gen: v5e
topology: v5e:2x2
jax: 0.10.0
libtpu: 0.0.40
codegen_flags: <defaults>
</compile_context>

<pallas_src>
import functools
import math
import numpy as np

import jax
import jax.numpy as jnp
from jax.experimental import pallas as pl
from jax.experimental.pallas import tpu as pltpu

_BF16 = jnp.bfloat16
_LANE = 128
# Per-grid-step blocks are sized per sample; 48 MiB leaves headroom inside
# v7x's 64 MiB physical VMEM (v5e/v6e have 128 MiB).
_VMEM_LIMIT_BYTES = 48 * 1024 * 1024


def _round_up(v, m):
    return ((v + m - 1) // m) * m


# ----------------------------------------------------------------------------
# BlockSpec helpers: grid = (N,) over the batch.
# ----------------------------------------------------------------------------
def _sample_spec(shape):
    """Per-sample block of an (N, ...) array: batch axis gridded, rest whole."""
    zeros = (0,) * len(shape)
    return pl.BlockSpec((None,) + tuple(shape), lambda n: (n,) + zeros)


def _resident_spec(shape):
    """Whole-array block, identical for every grid step (stays resident)."""
    zeros = (0,) * len(shape)
    return pl.BlockSpec(tuple(shape), lambda n: zeros)


# ----------------------------------------------------------------------------
# Pallas kernels (one batch sample per grid step; lane dim = H*W)
# ----------------------------------------------------------------------------
def _make_head_kernel(has_skip, shared_input):
    """bnA1+ReLU -> convA1 -> bnA2+ReLU  (branch A prologue)
       bnB1+ReLU -> convB1 -> bnB2+ReLU  (branch B prologue, stride pre-applied)
       [bnS+ReLU -> convS]               (skip path)
       1x1-conv biases are folded into the following BN shift on the host."""

    def kernel(*refs):
        it = iter(refs)
        x_ref = next(it)
        xs_ref = x_ref if shared_input else next(it)
        sA1 = next(it); tA1 = next(it); wA1 = next(it)
        sA2 = next(it); tA2 = next(it)
        sB1 = next(it); tB1 = next(it); wB1 = next(it)
        sB2 = next(it); tB2 = next(it)
        if has_skip:
            sS = next(it); tS = next(it); wS = next(it); bS = next(it)
        outA = next(it); outB = next(it)
        if has_skip:
            outS = next(it)

        x = x_ref[...]                                   # (Cin, H*W) f32
        xs = x if shared_input else xs_ref[...]

        # branch A: BN-ReLU -> 1x1 conv -> BN-ReLU (feeds the 3x3 conv)
        ya = jnp.maximum(x * sA1[...] + tA1[...], 0.0).astype(_BF16)
        a1 = jnp.dot(wA1[...], ya, preferred_element_type=jnp.float32)
        outA[...] = jnp.maximum(a1 * sA2[...] + tA2[...], 0.0).astype(_BF16)

        # branch B head: BN-ReLU -> 1x1 conv (stride pre-applied) -> BN-ReLU
        yb = jnp.maximum(xs * sB1[...] + tB1[...], 0.0).astype(_BF16)
        b1 = jnp.dot(wB1[...], yb, preferred_element_type=jnp.float32)
        outB[...] = jnp.maximum(b1 * sB2[...] + tB2[...], 0.0).astype(_BF16)

        # skipLayer: BN-ReLU -> 1x1 conv
        if has_skip:
            ys = jnp.maximum(xs * sS[...] + tS[...], 0.0).astype(_BF16)
            outS[...] = (jnp.dot(wS[...], ys,
                                 preferred_element_type=jnp.float32) + bS[...])

    return kernel


def _make_tail_kernel(branch_cols):
    """convA2 (im2col matmul) | pyramid: per-branch 3x3 conv matmuls merged
       into ONE bilinear-upsample matmul | bnB3+ReLU -> convB2 | add ->
       bnC+ReLU -> convC | + skip.  `branch_cols` = static (offset, width) of
       each branch inside the lane-concatenated patch / interp operands."""

    def kernel(pA_ref, wA2_ref, pall_ref, wP_ref, kcat_ref,
               sB3, tB3, wB2_ref, sC, tC, wC_ref, bC, skip_ref, out_ref):
        # branch A: 3x3 conv as a single im2col matmul (f32 accumulation).
        a = jnp.dot(wA2_ref[...], pA_ref[...],
                    preferred_element_type=jnp.float32)

        # pyramid: `cardinality` tiny conv matmuls (static 128-aligned slices
        # of the concatenated patch slab), then ONE merged upsample matmul
        # against the row-stacked interpolation matrix.  Branch outputs never
        # touch HBM; biases are folded into tB3 on the host.
        t_parts = []
        for i, (off, width) in enumerate(branch_cols):
            t_parts.append(jnp.dot(wP_ref[i], pall_ref[:, off:off + width],
                                   preferred_element_type=jnp.float32))
        t_cat = (t_parts[0] if len(t_parts) == 1
                 else jnp.concatenate(t_parts, axis=1)).astype(_BF16)
        pyr = jnp.dot(t_cat, kcat_ref[...], preferred_element_type=jnp.float32)

        # bnB3-ReLU -> convB2 (1x1)
        yb3 = jnp.maximum(pyr * sB3[...] + tB3[...], 0.0).astype(_BF16)
        b = jnp.dot(wB2_ref[...], yb3, preferred_element_type=jnp.float32)

        # CaddTable(A, B) -> bnC-ReLU -> convC (1x1) -> + skip (residual add)
        yc = jnp.maximum((a + b) * sC[...] + tC[...], 0.0).astype(_BF16)
        cb = jnp.dot(wC_ref[...], yc, preferred_element_type=jnp.float32) + bC[...]
        out_ref[...] = cb + skip_ref[...]

    return kernel


# ----------------------------------------------------------------------------
# XLA glue: im2col slicing, fractional pooling gathers, interp matrices.
# ----------------------------------------------------------------------------
def _bn_scale_shift(gamma, beta, mean, var, eps=1e-5):
    scale = gamma / jnp.sqrt(var + eps)
    shift = beta - mean * scale
    return (scale.reshape(-1, 1).astype(jnp.float32),
            shift.reshape(-1, 1).astype(jnp.float32))


def _im2col(y, H, W, stride):
    """(N, C, H*W) -> (N, C*9, Ho*Wo) patches for a 3x3, pad=1 conv.
    Row ordering c*9 + (kh*3 + kw) matches w.reshape(Cout, Cin*9)."""
    N, C, _ = y.shape
    y4 = y.reshape(N, C, H, W)
    yp = jnp.pad(y4, ((0, 0), (0, 0), (1, 1), (1, 1)))
    Ho = (H + 2 - 3) // stride + 1
    Wo = (W + 2 - 3) // stride + 1
    taps = []
    for dh in range(3):
        for dw in range(3):
            taps.append(yp[:, :, dh:dh + (Ho - 1) * stride + 1:stride,
                              dw:dw + (Wo - 1) * stride + 1:stride])
    pat = jnp.stack(taps, axis=2)                        # (N, C, 9, Ho, Wo)
    return pat.reshape(N, C * 9, Ho * Wo), Ho, Wo


def _frac_pool_indices(in_size, out_size, sample=0.5):
    # PyTorch fractional-pooling interval sequence, kernel=2, fixed sample.
    if out_size == 1:
        return np.array([in_size - 2], dtype=np.int32)
    alpha = (in_size - 2) / (out_size - 1)
    idx = (np.floor((np.arange(out_size - 1) + sample) * alpha)
           - math.floor(sample * alpha))
    return np.concatenate([idx, [in_size - 2]]).astype(np.int32)


def _frac_maxpool2x2(y, H, W, ratio):
    """FractionalMaxPool2d(kernel=2, output_ratio=ratio), deterministic offsets."""
    N, C, _ = y.shape
    oH, oW = int(H * ratio), int(W * ratio)
    ih = jnp.asarray(_frac_pool_indices(H, oH))
    iw = jnp.asarray(_frac_pool_indices(W, oW))
    y4 = y.reshape(N, C, H, W)
    yh = jnp.maximum(y4[:, :, ih, :], y4[:, :, ih + 1, :])
    yp = jnp.maximum(yh[:, :, :, iw], yh[:, :, :, iw + 1])
    return yp.reshape(N, C, oH * oW), oH, oW


def _interp_matrix(in_size, out_size):
    # align_corners=True bilinear weights (UpsamplingBilinear2d).
    if in_size == 1:
        return np.ones((out_size, 1), np.float32)
    src = np.arange(out_size) * (in_size - 1) / (out_size - 1)
    i0 = np.minimum(np.floor(src).astype(np.int32), in_size - 2)
    frac = (src - i0).astype(np.float32)
    A = np.zeros((out_size, in_size), np.float32)
    A[np.arange(out_size), i0] = 1.0 - frac
    A[np.arange(out_size), i0 + 1] += frac
    return A


def _upsample_kron(hp, wp, H, W):
    """(hp*wp, H*W): per-sample bilinear upsample matrix (columns sum to 1)."""
    Ah = _interp_matrix(hp, H)                           # (H, hp)
    Aw = _interp_matrix(wp, W)                           # (W, wp)
    return np.kron(Ah, Aw).T.astype(np.float32)


# ----------------------------------------------------------------------------
# Residual forward (NCHW in / NCHW out, like the PyTorch module)
# ----------------------------------------------------------------------------
def residual_forward(x_nchw, p, inputResH, inputResW, stride=1, cardinality=4):
    x_nchw = x_nchw.astype(jnp.float32)
    N, Cin, H, W = x_nchw.shape
    half = p["convA1"]["w"].shape[0]
    D = p["convB1"]["w"].shape[0]
    numOut = p["convC"]["w"].shape[0]

    Ho = (H + 2 - 3) // stride + 1
    Wo = (W + 2 - 3) // stride + 1
    assert Ho == int(inputResH) and Wo == int(inputResW), \
        "upsample target must match conv output resolution"

    L_in = H * W
    L_out = Ho * Wo

    # per-sample, lane-dense layout: (N, C, H*W)
    x3 = x_nchw.reshape(N, Cin, L_in)
    shared_input = (stride == 1)
    if not shared_input:
        xs3 = x_nchw[:, :, ::stride, ::stride].reshape(N, Cin, -1)
        assert xs3.shape[-1] == L_out

    # folded BN scale/shift (conv biases folded into the following BN shift)
    sA1, tA1 = _bn_scale_shift(**p["bnA1"])
    sA2, tA2 = _bn_scale_shift(**p["bnA2"])
    tA2 = tA2 + sA2 * p["convA1"]["b"].reshape(-1, 1)
    sB1, tB1 = _bn_scale_shift(**p["bnB1"])
    sB2, tB2 = _bn_scale_shift(**p["bnB2"])
    tB2 = tB2 + sB2 * p["convB1"]["b"].reshape(-1, 1)
    sB3, tB3 = _bn_scale_shift(**p["bnB3"])
    bP_sum = sum(p["pyr"][i]["b"] for i in range(cardinality))
    tB3 = tB3 + sB3 * bP_sum.reshape(-1, 1)
    sC, tC = _bn_scale_shift(**p["bnC"])
    tC = tC + sC * (p["convA2"]["b"] + p["convB2"]["b"]).reshape(-1, 1)

    wA1 = p["convA1"]["w"][:, :, 0, 0].astype(_BF16)
    wB1 = p["convB1"]["w"][:, :, 0, 0].astype(_BF16)

    has_skip = p["skip"] is not None
    cparams = pltpu.CompilerParams(dimension_semantics=("parallel",),
                                   vmem_limit_bytes=_VMEM_LIMIT_BYTES)

    # ---------------- head kernel ----------------
    head_inputs = [x3]
    head_specs = [_sample_spec((Cin, L_in))]
    if not shared_input:
        head_inputs.append(xs3)
        head_specs.append(_sample_spec((Cin, L_out)))
    for arr in (sA1, tA1, wA1, sA2, tA2, sB1, tB1, wB1, sB2, tB2):
        head_inputs.append(arr)
        head_specs.append(_resident_spec(arr.shape))
    if has_skip:
        sS, tS = _bn_scale_shift(**p["skip"]["bn"])
        wS = p["skip"]["conv"]["w"][:, :, 0, 0].astype(_BF16)
        bS = p["skip"]["conv"]["b"].reshape(-1, 1).astype(jnp.float32)
        for arr in (sS, tS, wS, bS):
            head_inputs.append(arr)
            head_specs.append(_resident_spec(arr.shape))

    head_out_shapes = [jax.ShapeDtypeStruct((N, half, L_in), _BF16),
                       jax.ShapeDtypeStruct((N, D, L_out), _BF16)]
    head_out_specs = [_sample_spec((half, L_in)), _sample_spec((D, L_out))]
    if has_skip:
        head_out_shapes.append(jax.ShapeDtypeStruct((N, numOut, L_out),
                                                    jnp.float32))
        head_out_specs.append(_sample_spec((numOut, L_out)))

    head_out = pl.pallas_call(
        _make_head_kernel(has_skip, shared_input),
        grid=(N,),
        out_shape=tuple(head_out_shapes),
        in_specs=head_specs,
        out_specs=tuple(head_out_specs),
        compiler_params=cparams,
    )(*head_inputs)

    if has_skip:
        a2, b2, skip3 = head_out
    else:
        a2, b2 = head_out
        skip3 = x3            # identity skip (numIn == numOut, stride == 1)

    # ---------------- tail kernel operands (host glue) ----------------
    # branch A 3x3 im2col (post-bnA2-ReLU activation -> correct zero padding)
    patchesA, HoA, WoA = _im2col(a2, H, W, stride)
    assert (HoA, WoA) == (Ho, Wo)
    wA2 = p["convA2"]["w"].reshape(half, half * 9).astype(_BF16)

    # pyramid: fractional max pool + im2col (host), lane-padded to 128-aligned
    # widths and concatenated so the kernel can do ONE upsample matmul against
    # the row-stacked interpolation matrix (no batch block-diagonal).
    sc = 2.0 ** (1.0 / cardinality)
    p_parts, k_parts, branch_cols = [], [], []
    off = 0
    for i in range(cardinality):
        ratio = 1.0 / (sc ** (i + 1))
        pooled, hp, wp = _frac_maxpool2x2(b2, Ho, Wo, ratio)
        patches_i, hpo, wpo = _im2col(pooled, hp, wp, 1)
        assert (hpo, wpo) == (hp, wp)
        L = hp * wp
        Lp = _round_up(L, _LANE)
        p_parts.append(jnp.pad(patches_i, ((0, 0), (0, 0), (0, Lp - L))))
        K = np.zeros((Lp, L_out), np.float32)
        K[:L] = _upsample_kron(hp, wp, Ho, Wo)
        k_parts.append(K)
        branch_cols.append((off, Lp))
        off += Lp
    p_all = jnp.concatenate(p_parts, axis=-1).astype(_BF16)   # (N, D*9, sumLp)
    k_cat = jnp.asarray(np.concatenate(k_parts, axis=0)).astype(_BF16)
    w_pyr = jnp.stack([p["pyr"][i]["w"].reshape(D, D * 9)
                       for i in range(cardinality)]).astype(_BF16)

    wB2 = p["convB2"]["w"][:, :, 0, 0].astype(_BF16)
    wC = p["convC"]["w"][:, :, 0, 0].astype(_BF16)
    bC = p["convC"]["b"].reshape(-1, 1).astype(jnp.float32)

    tail_inputs = [patchesA.astype(_BF16), wA2, p_all, w_pyr, k_cat,
                   sB3, tB3, wB2, sC, tC, wC, bC, skip3]
    tail_specs = [
        _sample_spec((half * 9, L_out)),          # patchesA
        _resident_spec(wA2.shape),
        _sample_spec((D * 9, off)),               # concatenated pyramid patches
        _resident_spec(w_pyr.shape),
        _resident_spec(k_cat.shape),
        _resident_spec(sB3.shape), _resident_spec(tB3.shape),
        _resident_spec(wB2.shape),
        _resident_spec(sC.shape), _resident_spec(tC.shape),
        _resident_spec(wC.shape), _resident_spec(bC.shape),
        _sample_spec((numOut, L_out)),            # skip
    ]

    out3 = pl.pallas_call(
        _make_tail_kernel(tuple(branch_cols)),
        grid=(N,),
        out_shape=jax.ShapeDtypeStruct((N, numOut, L_out), jnp.float32),
        in_specs=tail_specs,
        out_specs=_sample_spec((numOut, L_out)),
        compiler_params=cparams,
    )(*tail_inputs)

    return out3.reshape(N, numOut, Ho, Wo)


# ----------------------------------------------------------------------------
# Deterministic parameter initialization (matching module __init__ shapes)
# ----------------------------------------------------------------------------
def _bn_params(key, c):
    k1, k2, k3, k4 = jax.random.split(key, 4)
    return dict(
        gamma=1.0 + 0.1 * jax.random.normal(k1, (c,), jnp.float32),
        beta=0.1 * jax.random.normal(k2, (c,), jnp.float32),
        mean=0.1 * jax.random.normal(k3, (c,), jnp.float32),
        var=1.0 + 0.5 * jax.random.uniform(k4, (c,), jnp.float32),
    )


def _conv_params(key, cout, cin, k):
    k1, k2 = jax.random.split(key)
    fan = cin * k * k
    return dict(
        w=jax.random.normal(k1, (cout, cin, k, k), jnp.float32) * math.sqrt(2.0 / fan),
        b=0.01 * jax.random.normal(k2, (cout,), jnp.float32),
    )


def init_residual_params(key, numIn, numOut, baseWidth=9, cardinality=4,
                         stride=1, useConv=False):
    half = numOut // 2
    D = numOut // baseWidth
    keys = jax.random.split(key, 16 + cardinality)
    p = {
        "bnA1": _bn_params(keys[0], numIn),
        "convA1": _conv_params(keys[1], half, numIn, 1),
        "bnA2": _bn_params(keys[2], half),
        "convA2": _conv_params(keys[3], half, half, 3),
        "bnB1": _bn_params(keys[4], numIn),
        "convB1": _conv_params(keys[5], D, numIn, 1),
        "bnB2": _bn_params(keys[6], D),
        "pyr": [_conv_params(keys[16 + i], D, D, 3) for i in range(cardinality)],
        "bnB3": _bn_params(keys[7], D),
        "convB2": _conv_params(keys[8], half, D, 1),
        "bnC": _bn_params(keys[9], half),
        "convC": _conv_params(keys[10], numOut, half, 1),
    }
    if numIn == numOut and stride == 1 and (not useConv):
        p["skip"] = None
    else:
        p["skip"] = dict(
            bn=_bn_params(keys[11], numIn),
            conv=_conv_params(keys[12], numOut, numIn, 1),
        )
    return p


# ----------------------------------------------------------------------------
if __name__ == "__main__":
    key = jax.random.PRNGKey(0)
    kx, kp = jax.random.split(key)

    N, numIn, numOut, H, W = 2, 16, 18, 16, 16   # baseWidth=9 -> D=2, card=4
    x = jax.random.normal(kx, (N, numIn, H, W), jnp.float32)
    params = init_residual_params(kp, numIn, numOut, baseWidth=9,
                                  cardinality=4, stride=1, useConv=False)

    fwd = jax.jit(functools.partial(residual_forward, inputResH=H, inputResW=W,
                                    stride=1, cardinality=4))
    out = jax.block_until_ready(fwd(x, params))
    assert out.shape == (N, numOut, H, W), out.shape
    assert bool(jnp.all(jnp.isfinite(out)))
    print("KERNEL_OK")
</pallas_src>

<mosaic_0001>
module attributes {stable_mosaic.version = 11 : i64} {
  func.func @kernel(%arg0: i32, %arg1: memref<1x16x256xf32, #tpu.memory_space<vmem>>, %arg2: memref<16x1xf32, #tpu.memory_space<vmem>>, %arg3: memref<16x1xf32, #tpu.memory_space<vmem>>, %arg4: memref<9x16xbf16, #tpu.memory_space<vmem>>, %arg5: memref<9x1xf32, #tpu.memory_space<vmem>>, %arg6: memref<9x1xf32, #tpu.memory_space<vmem>>, %arg7: memref<16x1xf32, #tpu.memory_space<vmem>>, %arg8: memref<16x1xf32, #tpu.memory_space<vmem>>, %arg9: memref<2x16xbf16, #tpu.memory_space<vmem>>, %arg10: memref<2x1xf32, #tpu.memory_space<vmem>>, %arg11: memref<2x1xf32, #tpu.memory_space<vmem>>, %arg12: memref<16x1xf32, #tpu.memory_space<vmem>>, %arg13: memref<16x1xf32, #tpu.memory_space<vmem>>, %arg14: memref<18x16xbf16, #tpu.memory_space<vmem>>, %arg15: memref<18x1xf32, #tpu.memory_space<vmem>>, %arg16: memref<1x9x256xbf16, #tpu.memory_space<vmem>>, %arg17: memref<1x2x256xbf16, #tpu.memory_space<vmem>>, %arg18: memref<1x18x256xf32, #tpu.memory_space<vmem>>) attributes {dimension_semantics = [#tpu.dimension_semantics<parallel>], iteration_bounds = array<i64: 2>, scalar_prefetch = 0 : i64, scratch_operands = 0 : i64, tpu.core_type = #tpu.core_type<tc>, window_params = [{transform_indices = @transform_0, window_bounds = array<i64: 1, 16, 256>}, {pipeline_mode = #tpu.pipeline_mode<synchronous>, transform_indices = @transform_1, window_bounds = array<i64: 16, 1>}, {pipeline_mode = #tpu.pipeline_mode<synchronous>, transform_indices = @transform_2, window_bounds = array<i64: 16, 1>}, {pipeline_mode = #tpu.pipeline_mode<synchronous>, transform_indices = @transform_3, window_bounds = array<i64: 9, 16>}, {pipeline_mode = #tpu.pipeline_mode<synchronous>, transform_indices = @transform_4, window_bounds = array<i64: 9, 1>}, {pipeline_mode = #tpu.pipeline_mode<synchronous>, transform_indices = @transform_5, window_bounds = array<i64: 9, 1>}, {pipeline_mode = #tpu.pipeline_mode<synchronous>, transform_indices = @transform_6, window_bounds = array<i64: 16, 1>}, {pipeline_mode = #tpu.pipeline_mode<synchronous>, transform_indices = @transform_7, window_bounds = array<i64: 16, 1>}, {pipeline_mode = #tpu.pipeline_mode<synchronous>, transform_indices = @transform_8, window_bounds = array<i64: 2, 16>}, {pipeline_mode = #tpu.pipeline_mode<synchronous>, transform_indices = @transform_9, window_bounds = array<i64: 2, 1>}, {pipeline_mode = #tpu.pipeline_mode<synchronous>, transform_indices = @transform_10, window_bounds = array<i64: 2, 1>}, {pipeline_mode = #tpu.pipeline_mode<synchronous>, transform_indices = @transform_11, window_bounds = array<i64: 16, 1>}, {pipeline_mode = #tpu.pipeline_mode<synchronous>, transform_indices = @transform_12, window_bounds = array<i64: 16, 1>}, {pipeline_mode = #tpu.pipeline_mode<synchronous>, transform_indices = @transform_13, window_bounds = array<i64: 18, 16>}, {pipeline_mode = #tpu.pipeline_mode<synchronous>, transform_indices = @transform_14, window_bounds = array<i64: 18, 1>}, {transform_indices = @transform_15, window_bounds = array<i64: 1, 9, 256>}, {transform_indices = @transform_16, window_bounds = array<i64: 1, 2, 256>}, {transform_indices = @transform_17, window_bounds = array<i64: 1, 18, 256>}]} {
    %c0 = arith.constant 0 : index
    %c0_0 = arith.constant 0 : index
    %c0_1 = arith.constant 0 : index
    %0 = vector.load %arg1[%c0, %c0_0, %c0_1] : memref<1x16x256xf32, #tpu.memory_space<vmem>>, vector<1x16x256xf32>
    %1 = vector.shape_cast %0 : vector<1x16x256xf32> to vector<16x256xf32>
    %c0_2 = arith.constant 0 : index
    %c0_3 = arith.constant 0 : index
    %2 = vector.load %arg2[%c0_2, %c0_3] : memref<16x1xf32, #tpu.memory_space<vmem>>, vector<16x1xf32>
    %3 = vector.broadcast %2 : vector<16x1xf32> to vector<16x256xf32>
    %4 = arith.mulf %1, %3 : vector<16x256xf32>
    %c0_4 = arith.constant 0 : index
    %c0_5 = arith.constant 0 : index
    %5 = vector.load %arg3[%c0_4, %c0_5] : memref<16x1xf32, #tpu.memory_space<vmem>>, vector<16x1xf32>
    %6 = vector.broadcast %5 : vector<16x1xf32> to vector<16x256xf32>
    %7 = arith.addf %4, %6 : vector<16x256xf32>
    %cst = arith.constant 0.000000e+00 : f32
    %8 = vector.broadcast %cst : f32 to vector<16x256xf32>
    %9 = arith.maximumf %7, %8 : vector<16x256xf32>
    %10 = arith.truncf %9 : vector<16x256xf32> to vector<16x256xbf16>
    %c0_6 = arith.constant 0 : index
    %c0_7 = arith.constant 0 : index
    %11 = vector.load %arg4[%c0_6, %c0_7] : memref<9x16xbf16, #tpu.memory_space<vmem>>, vector<9x16xbf16>
    %cst_8 = arith.constant dense<0.000000e+00> : vector<9x256xf32>
    %12 = tpu.matmul %11, %10, %cst_8 {dimension_numbers = #tpu.dot_dimension_numbers<[1], [0], [0], [1], [0, 0, 1, 1], [], []>} : vector<9x16xbf16>, vector<16x256xbf16>, vector<9x256xf32> -> vector<9x256xf32>
    %c0_9 = arith.constant 0 : index
    %c0_10 = arith.constant 0 : index
    %13 = vector.load %arg5[%c0_9, %c0_10] : memref<9x1xf32, #tpu.memory_space<vmem>>, vector<9x1xf32>
    %14 = vector.broadcast %13 : vector<9x1xf32> to vector<9x256xf32>
    %15 = arith.mulf %12, %14 : vector<9x256xf32>
    %c0_11 = arith.constant 0 : index
    %c0_12 = arith.constant 0 : index
    %16 = vector.load %arg6[%c0_11, %c0_12] : memref<9x1xf32, #tpu.memory_space<vmem>>, vector<9x1xf32>
    %17 = vector.broadcast %16 : vector<9x1xf32> to vector<9x256xf32>
    %18 = arith.addf %15, %17 : vector<9x256xf32>
    %cst_13 = arith.constant 0.000000e+00 : f32
    %19 = vector.broadcast %cst_13 : f32 to vector<9x256xf32>
    %20 = arith.maximumf %18, %19 : vector<9x256xf32>
    %21 = arith.truncf %20 : vector<9x256xf32> to vector<9x256xbf16>
    %c0_14 = arith.constant 0 : index
    %c0_15 = arith.constant 0 : index
    %c0_16 = arith.constant 0 : index
    %22 = vector.load %arg16[%c0_14, %c0_15, %c0_16] : memref<1x9x256xbf16, #tpu.memory_space<vmem>>, vector<1x9x256xbf16>
    %23 = vector.shape_cast %22 : vector<1x9x256xbf16> to vector<9x256xbf16>
    %24 = vector.shape_cast %21 : vector<9x256xbf16> to vector<1x9x256xbf16>
    tpu.vector_store %arg16[%c0_14, %c0_15, %c0_16], %24 {strides = array<i32>} : memref<1x9x256xbf16, #tpu.memory_space<vmem>>, vector<1x9x256xbf16>,
    %c0_17 = arith.constant 0 : index
    %c0_18 = arith.constant 0 : index
    %25 = vector.load %arg7[%c0_17, %c0_18] : memref<16x1xf32, #tpu.memory_space<vmem>>, vector<16x1xf32>
    %26 = vector.broadcast %25 : vector<16x1xf32> to vector<16x256xf32>
    %27 = arith.mulf %1, %26 : vector<16x256xf32>
    %c0_19 = arith.constant 0 : index
    %c0_20 = arith.constant 0 : index
    %28 = vector.load %arg8[%c0_19, %c0_20] : memref<16x1xf32, #tpu.memory_space<vmem>>, vector<16x1xf32>
    %29 = vector.broadcast %28 : vector<16x1xf32> to vector<16x256xf32>
    %30 = arith.addf %27, %29 : vector<16x256xf32>
    %cst_21 = arith.constant 0.000000e+00 : f32
    %31 = vector.broadcast %cst_21 : f32 to vector<16x256xf32>
    %32 = arith.maximumf %30, %31 : vector<16x256xf32>
    %33 = arith.truncf %32 : vector<16x256xf32> to vector<16x256xbf16>
    %c0_22 = arith.constant 0 : index
    %c0_23 = arith.constant 0 : index
    %34 = vector.load %arg9[%c0_22, %c0_23] : memref<2x16xbf16, #tpu.memory_space<vmem>>, vector<2x16xbf16>
    %cst_24 = arith.constant dense<0.000000e+00> : vector<2x256xf32>
    %35 = tpu.matmul %34, %33, %cst_24 {dimension_numbers = #tpu.dot_dimension_numbers<[1], [0], [0], [1], [0, 0, 1, 1], [], []>} : vector<2x16xbf16>, vector<16x256xbf16>, vector<2x256xf32> -> vector<2x256xf32>
    %c0_25 = arith.constant 0 : index
    %c0_26 = arith.constant 0 : index
    %36 = vector.load %arg10[%c0_25, %c0_26] : memref<2x1xf32, #tpu.memory_space<vmem>>, vector<2x1xf32>
    %37 = vector.broadcast %36 : vector<2x1xf32> to vector<2x256xf32>
    %38 = arith.mulf %35, %37 : vector<2x256xf32>
    %c0_27 = arith.constant 0 : index
    %c0_28 = arith.constant 0 : index
    %39 = vector.load %arg11[%c0_27, %c0_28] : memref<2x1xf32, #tpu.memory_space<vmem>>, vector<2x1xf32>
    %40 = vector.broadcast %39 : vector<2x1xf32> to vector<2x256xf32>
    %41 = arith.addf %38, %40 : vector<2x256xf32>
    %cst_29 = arith.constant 0.000000e+00 : f32
    %42 = vector.broadcast %cst_29 : f32 to vector<2x256xf32>
    %43 = arith.maximumf %41, %42 : vector<2x256xf32>
    %44 = arith.truncf %43 : vector<2x256xf32> to vector<2x256xbf16>
    %c0_30 = arith.constant 0 : index
    %c0_31 = arith.constant 0 : index
    %c0_32 = arith.constant 0 : index
    %45 = vector.load %arg17[%c0_30, %c0_31, %c0_32] : memref<1x2x256xbf16, #tpu.memory_space<vmem>>, vector<1x2x256xbf16>
    %46 = vector.shape_cast %45 : vector<1x2x256xbf16> to vector<2x256xbf16>
    %47 = vector.shape_cast %44 : vector<2x256xbf16> to vector<1x2x256xbf16>
    tpu.vector_store %arg17[%c0_30, %c0_31, %c0_32], %47 {strides = array<i32>} : memref<1x2x256xbf16, #tpu.memory_space<vmem>>, vector<1x2x256xbf16>,
    %c0_33 = arith.constant 0 : index
    %c0_34 = arith.constant 0 : index
    %48 = vector.load %arg12[%c0_33, %c0_34] : memref<16x1xf32, #tpu.memory_space<vmem>>, vector<16x1xf32>
    %49 = vector.broadcast %48 : vector<16x1xf32> to vector<16x256xf32>
    %50 = arith.mulf %1, %49 : vector<16x256xf32>
    %c0_35 = arith.constant 0 : index
    %c0_36 = arith.constant 0 : index
    %51 = vector.load %arg13[%c0_35, %c0_36] : memref<16x1xf32, #tpu.memory_space<vmem>>, vector<16x1xf32>
    %52 = vector.broadcast %51 : vector<16x1xf32> to vector<16x256xf32>
    %53 = arith.addf %50, %52 : vector<16x256xf32>
    %cst_37 = arith.constant 0.000000e+00 : f32
    %54 = vector.broadcast %cst_37 : f32 to vector<16x256xf32>
    %55 = arith.maximumf %53, %54 : vector<16x256xf32>
    %56 = arith.truncf %55 : vector<16x256xf32> to vector<16x256xbf16>
    %c0_38 = arith.constant 0 : index
    %c0_39 = arith.constant 0 : index
    %57 = vector.load %arg14[%c0_38, %c0_39] : memref<18x16xbf16, #tpu.memory_space<vmem>>, vector<18x16xbf16>
    %cst_40 = arith.constant dense<0.000000e+00> : vector<18x256xf32>
    %58 = tpu.matmul %57, %56, %cst_40 {dimension_numbers = #tpu.dot_dimension_numbers<[1], [0], [0], [1], [0, 0, 1, 1], [], []>} : vector<18x16xbf16>, vector<16x256xbf16>, vector<18x256xf32> -> vector<18x256xf32>
    %c0_41 = arith.constant 0 : index
    %c0_42 = arith.constant 0 : index
    %59 = vector.load %arg15[%c0_41, %c0_42] : memref<18x1xf32, #tpu.memory_space<vmem>>, vector<18x1xf32>
    %60 = vector.broadcast %59 : vector<18x1xf32> to vector<18x256xf32>
    %61 = arith.addf %58, %60 : vector<18x256xf32>
    %c0_43 = arith.constant 0 : index
    %c0_44 = arith.constant 0 : index
    %c0_45 = arith.constant 0 : index
    %62 = vector.load %arg18[%c0_43, %c0_44, %c0_45] : memref<1x18x256xf32, #tpu.memory_space<vmem>>, vector<1x18x256xf32>
    %63 = vector.shape_cast %62 : vector<1x18x256xf32> to vector<18x256xf32>
    %64 = vector.shape_cast %61 : vector<18x256xf32> to vector<1x18x256xf32>
    tpu.vector_store %arg18[%c0_43, %c0_44, %c0_45], %64 {strides = array<i32>} : memref<1x18x256xf32, #tpu.memory_space<vmem>>, vector<1x18x256xf32>,
    return
  }
  func.func @transform_0(%arg0: i32) -> (i32, i32, i32) {
    %c0_i32 = arith.constant 0 : i32
    %c0_i32_0 = arith.constant 0 : i32
    %c0_i32_1 = arith.constant 0 : i32
    return %arg0, %c0_i32, %c0_i32_0 : i32, i32, i32
  }
  func.func @transform_1(%arg0: i32) -> (i32, i32) {
    %c0_i32 = arith.constant 0 : i32
    %c0_i32_0 = arith.constant 0 : i32
    %c0_i32_1 = arith.constant 0 : i32
    return %c0_i32, %c0_i32_0 : i32, i32
  }
  func.func @transform_2(%arg0: i32) -> (i32, i32) {
    %c0_i32 = arith.constant 0 : i32
    %c0_i32_0 = arith.constant 0 : i32
    %c0_i32_1 = arith.constant 0 : i32
    return %c0_i32, %c0_i32_0 : i32, i32
  }
  func.func @transform_3(%arg0: i32) -> (i32, i32) {
    %c0_i32 = arith.constant 0 : i32
    %c0_i32_0 = arith.constant 0 : i32
    %c0_i32_1 = arith.constant 0 : i32
    return %c0_i32, %c0_i32_0 : i32, i32
  }
  func.func @transform_4(%arg0: i32) -> (i32, i32) {
    %c0_i32 = arith.constant 0 : i32
    %c0_i32_0 = arith.constant 0 : i32
    %c0_i32_1 = arith.constant 0 : i32
    return %c0_i32, %c0_i32_0 : i32, i32
  }
  func.func @transform_5(%arg0: i32) -> (i32, i32) {
    %c0_i32 = arith.constant 0 : i32
    %c0_i32_0 = arith.constant 0 : i32
    %c0_i32_1 = arith.constant 0 : i32
    return %c0_i32, %c0_i32_0 : i32, i32
  }
  func.func @transform_6(%arg0: i32) -> (i32, i32) {
    %c0_i32 = arith.constant 0 : i32
    %c0_i32_0 = arith.constant 0 : i32
    %c0_i32_1 = arith.constant 0 : i32
    return %c0_i32, %c0_i32_0 : i32, i32
  }
  func.func @transform_7(%arg0: i32) -> (i32, i32) {
    %c0_i32 = arith.constant 0 : i32
    %c0_i32_0 = arith.constant 0 : i32
    %c0_i32_1 = arith.constant 0 : i32
    return %c0_i32, %c0_i32_0 : i32, i32
  }
  func.func @transform_8(%arg0: i32) -> (i32, i32) {
    %c0_i32 = arith.constant 0 : i32
    %c0_i32_0 = arith.constant 0 : i32
    %c0_i32_1 = arith.constant 0 : i32
    return %c0_i32, %c0_i32_0 : i32, i32
  }
  func.func @transform_9(%arg0: i32) -> (i32, i32) {
    %c0_i32 = arith.constant 0 : i32
    %c0_i32_0 = arith.constant 0 : i32
    %c0_i32_1 = arith.constant 0 : i32
    return %c0_i32, %c0_i32_0 : i32, i32
  }
  func.func @transform_10(%arg0: i32) -> (i32, i32) {
    %c0_i32 = arith.constant 0 : i32
    %c0_i32_0 = arith.constant 0 : i32
    %c0_i32_1 = arith.constant 0 : i32
    return %c0_i32, %c0_i32_0 : i32, i32
  }
  func.func @transform_11(%arg0: i32) -> (i32, i32) {
    %c0_i32 = arith.constant 0 : i32
    %c0_i32_0 = arith.constant 0 : i32
    %c0_i32_1 = arith.constant 0 : i32
    return %c0_i32, %c0_i32_0 : i32, i32
  }
  func.func @transform_12(%arg0: i32) -> (i32, i32) {
    %c0_i32 = arith.constant 0 : i32
    %c0_i32_0 = arith.constant 0 : i32
    %c0_i32_1 = arith.constant 0 : i32
    return %c0_i32, %c0_i32_0 : i32, i32
  }
  func.func @transform_13(%arg0: i32) -> (i32, i32) {
    %c0_i32 = arith.constant 0 : i32
    %c0_i32_0 = arith.constant 0 : i32
    %c0_i32_1 = arith.constant 0 : i32
    return %c0_i32, %c0_i32_0 : i32, i32
  }
  func.func @transform_14(%arg0: i32) -> (i32, i32) {
    %c0_i32 = arith.constant 0 : i32
    %c0_i32_0 = arith.constant 0 : i32
    %c0_i32_1 = arith.constant 0 : i32
    return %c0_i32, %c0_i32_0 : i32, i32
  }
  func.func @transform_15(%arg0: i32) -> (i32, i32, i32) {
    %c0_i32 = arith.constant 0 : i32
    %c0_i32_0 = arith.constant 0 : i32
    %c0_i32_1 = arith.constant 0 : i32
    return %arg0, %c0_i32, %c0_i32_0 : i32, i32, i32
  }
  func.func @transform_16(%arg0: i32) -> (i32, i32, i32) {
    %c0_i32 = arith.constant 0 : i32
    %c0_i32_0 = arith.constant 0 : i32
    %c0_i32_1 = arith.constant 0 : i32
    return %arg0, %c0_i32, %c0_i32_0 : i32, i32, i32
  }
  func.func @transform_17(%arg0: i32) -> (i32, i32, i32) {
    %c0_i32 = arith.constant 0 : i32
    %c0_i32_0 = arith.constant 0 : i32
    %c0_i32_1 = arith.constant 0 : i32
    return %arg0, %c0_i32, %c0_i32_0 : i32, i32, i32
  }
}

module attributes {stable_mosaic.version = 11 : i64} {
  func.func @kernel(%arg0: i32, %arg1: memref<1x81x256xbf16, #tpu.memory_space<vmem>>, %arg2: memref<9x81xbf16, #tpu.memory_space<vmem>>, %arg3: memref<1x18x640xbf16, #tpu.memory_space<vmem>>, %arg4: memref<4x2x18xbf16, #tpu.memory_space<vmem>>, %arg5: memref<640x256xbf16, #tpu.memory_space<vmem>>, %arg6: memref<2x1xf32, #tpu.memory_space<vmem>>, %arg7: memref<2x1xf32, #tpu.memory_space<vmem>>, %arg8: memref<9x2xbf16, #tpu.memory_space<vmem>>, %arg9: memref<9x1xf32, #tpu.memory_space<vmem>>, %arg10: memref<9x1xf32, #tpu.memory_space<vmem>>, %arg11: memref<18x9xbf16, #tpu.memory_space<vmem>>, %arg12: memref<18x1xf32, #tpu.memory_space<vmem>>, %arg13: memref<1x18x256xf32, #tpu.memory_space<vmem>>, %arg14: memref<1x18x256xf32, #tpu.memory_space<vmem>>) attributes {dimension_semantics = [#tpu.dimension_semantics<parallel>], iteration_bounds = array<i64: 2>, scalar_prefetch = 0 : i64, scratch_operands = 0 : i64, tpu.core_type = #tpu.core_type<tc>, window_params = [{transform_indices = @transform_0, window_bounds = array<i64: 1, 81, 256>}, {pipeline_mode = #tpu.pipeline_mode<synchronous>, transform_indices = @transform_1, window_bounds = array<i64: 9, 81>}, {transform_indices = @transform_2, window_bounds = array<i64: 1, 18, 640>}, {pipeline_mode = #tpu.pipeline_mode<synchronous>, transform_indices = @transform_3, window_bounds = array<i64: 4, 2, 18>}, {pipeline_mode = #tpu.pipeline_mode<synchronous>, transform_indices = @transform_4, window_bounds = array<i64: 640, 256>}, {pipeline_mode = #tpu.pipeline_mode<synchronous>, transform_indices = @transform_5, window_bounds = array<i64: 2, 1>}, {pipeline_mode = #tpu.pipeline_mode<synchronous>, transform_indices = @transform_6, window_bounds = array<i64: 2, 1>}, {pipeline_mode = #tpu.pipeline_mode<synchronous>, transform_indices = @transform_7, window_bounds = array<i64: 9, 2>}, {pipeline_mode = #tpu.pipeline_mode<synchronous>, transform_indices = @transform_8, window_bounds = array<i64: 9, 1>}, {pipeline_mode = #tpu.pipeline_mode<synchronous>, transform_indices = @transform_9, window_bounds = array<i64: 9, 1>}, {pipeline_mode = #tpu.pipeline_mode<synchronous>, transform_indices = @transform_10, window_bounds = array<i64: 18, 9>}, {pipeline_mode = #tpu.pipeline_mode<synchronous>, transform_indices = @transform_11, window_bounds = array<i64: 18, 1>}, {transform_indices = @transform_12, window_bounds = array<i64: 1, 18, 256>}, {transform_indices = @transform_13, window_bounds = array<i64: 1, 18, 256>}]} {
    %c0 = arith.constant 0 : index
    %c0_0 = arith.constant 0 : index
    %0 = vector.load %arg2[%c0, %c0_0] : memref<9x81xbf16, #tpu.memory_space<vmem>>, vector<9x81xbf16>
    %c0_1 = arith.constant 0 : index
    %c0_2 = arith.constant 0 : index
    %c0_3 = arith.constant 0 : index
    %1 = vector.load %arg1[%c0_1, %c0_2, %c0_3] : memref<1x81x256xbf16, #tpu.memory_space<vmem>>, vector<1x81x256xbf16>
    %2 = vector.shape_cast %1 : vector<1x81x256xbf16> to vector<81x256xbf16>
    %cst = arith.constant dense<0.000000e+00> : vector<9x256xf32>
    %3 = tpu.matmul %0, %2, %cst {dimension_numbers = #tpu.dot_dimension_numbers<[1], [0], [0], [1], [0, 0, 1, 1], [], []>} : vector<9x81xbf16>, vector<81x256xbf16>, vector<9x256xf32> -> vector<9x256xf32>
    %c0_4 = arith.constant 0 : index
    %c0_5 = arith.constant 0 : index
    %c0_6 = arith.constant 0 : index
    %4 = vector.load %arg4[%c0_4, %c0_5, %c0_6] : memref<4x2x18xbf16, #tpu.memory_space<vmem>>, vector<1x2x18xbf16>
    %5 = vector.shape_cast %4 : vector<1x2x18xbf16> to vector<2x18xbf16>
    %c0_7 = arith.constant 0 : index
    %c0_8 = arith.constant 0 : index
    %c0_9 = arith.constant 0 : index
    %6 = vector.load %arg3[%c0_7, %c0_8, %c0_9] : memref<1x18x640xbf16, #tpu.memory_space<vmem>>, vector<1x18x256xbf16>
    %7 = vector.shape_cast %6 : vector<1x18x256xbf16> to vector<18x256xbf16>
    %cst_10 = arith.constant dense<0.000000e+00> : vector<2x256xf32>
    %8 = tpu.matmul %5, %7, %cst_10 {dimension_numbers = #tpu.dot_dimension_numbers<[1], [0], [0], [1], [0, 0, 1, 1], [], []>} : vector<2x18xbf16>, vector<18x256xbf16>, vector<2x256xf32> -> vector<2x256xf32>
    %c1 = arith.constant 1 : index
    %c0_11 = arith.constant 0 : index
    %c0_12 = arith.constant 0 : index
    %9 = vector.load %arg4[%c1, %c0_11, %c0_12] : memref<4x2x18xbf16, #tpu.memory_space<vmem>>, vector<1x2x18xbf16>
    %10 = vector.shape_cast %9 : vector<1x2x18xbf16> to vector<2x18xbf16>
    %c0_13 = arith.constant 0 : index
    %c0_14 = arith.constant 0 : index
    %c256 = arith.constant 256 : index
    %11 = vector.load %arg3[%c0_13, %c0_14, %c256] : memref<1x18x640xbf16, #tpu.memory_space<vmem>>, vector<1x18x128xbf16>
    %12 = vector.shape_cast %11 : vector<1x18x128xbf16> to vector<18x128xbf16>
    %cst_15 = arith.constant dense<0.000000e+00> : vector<2x128xf32>
    %13 = tpu.matmul %10, %12, %cst_15 {dimension_numbers = #tpu.dot_dimension_numbers<[1], [0], [0], [1], [0, 0, 1, 1], [], []>} : vector<2x18xbf16>, vector<18x128xbf16>, vector<2x128xf32> -> vector<2x128xf32>
    %c2 = arith.constant 2 : index
    %c0_16 = arith.constant 0 : index
    %c0_17 = arith.constant 0 : index
    %14 = vector.load %arg4[%c2, %c0_16, %c0_17] : memref<4x2x18xbf16, #tpu.memory_space<vmem>>, vector<1x2x18xbf16>
    %15 = vector.shape_cast %14 : vector<1x2x18xbf16> to vector<2x18xbf16>
    %c0_18 = arith.constant 0 : index
    %c0_19 = arith.constant 0 : index
    %c384 = arith.constant 384 : index
    %16 = vector.load %arg3[%c0_18, %c0_19, %c384] : memref<1x18x640xbf16, #tpu.memory_space<vmem>>, vector<1x18x128xbf16>
    %17 = vector.shape_cast %16 : vector<1x18x128xbf16> to vector<18x128xbf16>
    %cst_20 = arith.constant dense<0.000000e+00> : vector<2x128xf32>
    %18 = tpu.matmul %15, %17, %cst_20 {dimension_numbers = #tpu.dot_dimension_numbers<[1], [0], [0], [1], [0, 0, 1, 1], [], []>} : vector<2x18xbf16>, vector<18x128xbf16>, vector<2x128xf32> -> vector<2x128xf32>
    %c3 = arith.constant 3 : index
    %c0_21 = arith.constant 0 : index
    %c0_22 = arith.constant 0 : index
    %19 = vector.load %arg4[%c3, %c0_21, %c0_22] : memref<4x2x18xbf16, #tpu.memory_space<vmem>>, vector<1x2x18xbf16>
    %20 = vector.shape_cast %19 : vector<1x2x18xbf16> to vector<2x18xbf16>
    %c0_23 = arith.constant 0 : index
    %c0_24 = arith.constant 0 : index
    %c512 = arith.constant 512 : index
    %21 = vector.load %arg3[%c0_23, %c0_24, %c512] : memref<1x18x640xbf16, #tpu.memory_space<vmem>>, vector<1x18x128xbf16>
    %22 = vector.shape_cast %21 : vector<1x18x128xbf16> to vector<18x128xbf16>
    %cst_25 = arith.constant dense<0.000000e+00> : vector<2x128xf32>
    %23 = tpu.matmul %20, %22, %cst_25 {dimension_numbers = #tpu.dot_dimension_numbers<[1], [0], [0], [1], [0, 0, 1, 1], [], []>} : vector<2x18xbf16>, vector<18x128xbf16>, vector<2x128xf32> -> vector<2x128xf32>
    %24 = tpu.concatenate %8, %13, %18, %23 in 1 : vector<2x256xf32>, vector<2x128xf32>, vector<2x128xf32>, vector<2x128xf32> -> vector<2x640xf32>
    %25 = arith.truncf %24 : vector<2x640xf32> to vector<2x640xbf16>
    %c0_26 = arith.constant 0 : index
    %c0_27 = arith.constant 0 : index
    %26 = vector.load %arg5[%c0_26, %c0_27] : memref<640x256xbf16, #tpu.memory_space<vmem>>, vector<640x256xbf16>
    %cst_28 = arith.constant dense<0.000000e+00> : vector<2x256xf32>
    %27 = tpu.matmul %25, %26, %cst_28 {dimension_numbers = #tpu.dot_dimension_numbers<[1], [0], [0], [1], [0, 0, 1, 1], [], []>} : vector<2x640xbf16>, vector<640x256xbf16>, vector<2x256xf32> -> vector<2x256xf32>
    %c0_29 = arith.constant 0 : index
    %c0_30 = arith.constant 0 : index
    %28 = vector.load %arg6[%c0_29, %c0_30] : memref<2x1xf32, #tpu.memory_space<vmem>>, vector<2x1xf32>
    %29 = vector.broadcast %28 : vector<2x1xf32> to vector<2x256xf32>
    %30 = arith.mulf %27, %29 : vector<2x256xf32>
    %c0_31 = arith.constant 0 : index
    %c0_32 = arith.constant 0 : index
    %31 = vector.load %arg7[%c0_31, %c0_32] : memref<2x1xf32, #tpu.memory_space<vmem>>, vector<2x1xf32>
    %32 = vector.broadcast %31 : vector<2x1xf32> to vector<2x256xf32>
    %33 = arith.addf %30, %32 : vector<2x256xf32>
    %cst_33 = arith.constant 0.000000e+00 : f32
    %34 = vector.broadcast %cst_33 : f32 to vector<2x256xf32>
    %35 = arith.maximumf %33, %34 : vector<2x256xf32>
    %36 = arith.truncf %35 : vector<2x256xf32> to vector<2x256xbf16>
    %c0_34 = arith.constant 0 : index
    %c0_35 = arith.constant 0 : index
    %37 = vector.load %arg8[%c0_34, %c0_35] : memref<9x2xbf16, #tpu.memory_space<vmem>>, vector<9x2xbf16>
    %cst_36 = arith.constant dense<0.000000e+00> : vector<9x256xf32>
    %38 = tpu.matmul %37, %36, %cst_36 {dimension_numbers = #tpu.dot_dimension_numbers<[1], [0], [0], [1], [0, 0, 1, 1], [], []>} : vector<9x2xbf16>, vector<2x256xbf16>, vector<9x256xf32> -> vector<9x256xf32>
    %39 = arith.addf %3, %38 : vector<9x256xf32>
    %c0_37 = arith.constant 0 : index
    %c0_38 = arith.constant 0 : index
    %40 = vector.load %arg9[%c0_37, %c0_38] : memref<9x1xf32, #tpu.memory_space<vmem>>, vector<9x1xf32>
    %41 = vector.broadcast %40 : vector<9x1xf32> to vector<9x256xf32>
    %42 = arith.mulf %39, %41 : vector<9x256xf32>
    %c0_39 = arith.constant 0 : index
    %c0_40 = arith.constant 0 : index
    %43 = vector.load %arg10[%c0_39, %c0_40] : memref<9x1xf32, #tpu.memory_space<vmem>>, vector<9x1xf32>
    %44 = vector.broadcast %43 : vector<9x1xf32> to vector<9x256xf32>
    %45 = arith.addf %42, %44 : vector<9x256xf32>
    %cst_41 = arith.constant 0.000000e+00 : f32
    %46 = vector.broadcast %cst_41 : f32 to vector<9x256xf32>
    %47 = arith.maximumf %45, %46 : vector<9x256xf32>
    %48 = arith.truncf %47 : vector<9x256xf32> to vector<9x256xbf16>
    %c0_42 = arith.constant 0 : index
    %c0_43 = arith.constant 0 : index
    %49 = vector.load %arg11[%c0_42, %c0_43] : memref<18x9xbf16, #tpu.memory_space<vmem>>, vector<18x9xbf16>
    %cst_44 = arith.constant dense<0.000000e+00> : vector<18x256xf32>
    %50 = tpu.matmul %49, %48, %cst_44 {dimension_numbers = #tpu.dot_dimension_numbers<[1], [0], [0], [1], [0, 0, 1, 1], [], []>} : vector<18x9xbf16>, vector<9x256xbf16>, vector<18x256xf32> -> vector<18x256xf32>
    %c0_45 = arith.constant 0 : index
    %c0_46 = arith.constant 0 : index
    %51 = vector.load %arg12[%c0_45, %c0_46] : memref<18x1xf32, #tpu.memory_space<vmem>>, vector<18x1xf32>
    %52 = vector.broadcast %51 : vector<18x1xf32> to vector<18x256xf32>
    %53 = arith.addf %50, %52 : vector<18x256xf32>
    %c0_47 = arith.constant 0 : index
    %c0_48 = arith.constant 0 : index
    %c0_49 = arith.constant 0 : index
    %54 = vector.load %arg13[%c0_47, %c0_48, %c0_49] : memref<1x18x256xf32, #tpu.memory_space<vmem>>, vector<1x18x256xf32>
    %55 = vector.shape_cast %54 : vector<1x18x256xf32> to vector<18x256xf32>
    %56 = arith.addf %53, %55 : vector<18x256xf32>
    %c0_50 = arith.constant 0 : index
    %c0_51 = arith.constant 0 : index
    %c0_52 = arith.constant 0 : index
    %57 = vector.load %arg14[%c0_50, %c0_51, %c0_52] : memref<1x18x256xf32, #tpu.memory_space<vmem>>, vector<1x18x256xf32>
    %58 = vector.shape_cast %57 : vector<1x18x256xf32> to vector<18x256xf32>
    %59 = vector.shape_cast %56 : vector<18x256xf32> to vector<1x18x256xf32>
    tpu.vector_store %arg14[%c0_50, %c0_51, %c0_52], %59 {strides = array<i32>} : memref<1x18x256xf32, #tpu.memory_space<vmem>>, vector<1x18x256xf32>,
    return
  }
  func.func @transform_0(%arg0: i32) -> (i32, i32, i32) {
    %c0_i32 = arith.constant 0 : i32
    %c0_i32_0 = arith.constant 0 : i32
    %c0_i32_1 = arith.constant 0 : i32
    return %arg0, %c0_i32, %c0_i32_0 : i32, i32, i32
  }
  func.func @transform_1(%arg0: i32) -> (i32, i32) {
    %c0_i32 = arith.constant 0 : i32
    %c0_i32_0 = arith.constant 0 : i32
    %c0_i32_1 = arith.constant 0 : i32
    return %c0_i32, %c0_i32_0 : i32, i32
  }
  func.func @transform_2(%arg0: i32) -> (i32, i32, i32) {
    %c0_i32 = arith.constant 0 : i32
    %c0_i32_0 = arith.constant 0 : i32
    %c0_i32_1 = arith.constant 0 : i32
    return %arg0, %c0_i32, %c0_i32_0 : i32, i32, i32
  }
  func.func @transform_3(%arg0: i32) -> (i32, i32, i32) {
    %c0_i32 = arith.constant 0 : i32
    %c0_i32_0 = arith.constant 0 : i32
    %c0_i32_1 = arith.constant 0 : i32
    %c0_i32_2 = arith.constant 0 : i32
    return %c0_i32, %c0_i32_0, %c0_i32_1 : i32, i32, i32
  }
  func.func @transform_4(%arg0: i32) -> (i32, i32) {
    %c0_i32 = arith.constant 0 : i32
    %c0_i32_0 = arith.constant 0 : i32
    %c0_i32_1 = arith.constant 0 : i32
    return %c0_i32, %c0_i32_0 : i32, i32
  }
  func.func @transform_5(%arg0: i32) -> (i32, i32) {
    %c0_i32 = arith.constant 0 : i32
    %c0_i32_0 = arith.constant 0 : i32
    %c0_i32_1 = arith.constant 0 : i32
    return %c0_i32, %c0_i32_0 : i32, i32
  }
  func.func @transform_6(%arg0: i32) -> (i32, i32) {
    %c0_i32 = arith.constant 0 : i32
    %c0_i32_0 = arith.constant 0 : i32
    %c0_i32_1 = arith.constant 0 : i32
    return %c0_i32, %c0_i32_0 : i32, i32
  }
  func.func @transform_7(%arg0: i32) -> (i32, i32) {
    %c0_i32 = arith.constant 0 : i32
    %c0_i32_0 = arith.constant 0 : i32
    %c0_i32_1 = arith.constant 0 : i32
    return %c0_i32, %c0_i32_0 : i32, i32
  }
  func.func @transform_8(%arg0: i32) -> (i32, i32) {
    %c0_i32 = arith.constant 0 : i32
    %c0_i32_0 = arith.constant 0 : i32
    %c0_i32_1 = arith.constant 0 : i32
    return %c0_i32, %c0_i32_0 : i32, i32
  }
  func.func @transform_9(%arg0: i32) -> (i32, i32) {
    %c0_i32 = arith.constant 0 : i32
    %c0_i32_0 = arith.constant 0 : i32
    %c0_i32_1 = arith.constant 0 : i32
    return %c0_i32, %c0_i32_0 : i32, i32
  }
  func.func @transform_10(%arg0: i32) -> (i32, i32) {
    %c0_i32 = arith.constant 0 : i32
    %c0_i32_0 = arith.constant 0 : i32
    %c0_i32_1 = arith.constant 0 : i32
    return %c0_i32, %c0_i32_0 : i32, i32
  }
  func.func @transform_11(%arg0: i32) -> (i32, i32) {
    %c0_i32 = arith.constant 0 : i32
    %c0_i32_0 = arith.constant 0 : i32
    %c0_i32_1 = arith.constant 0 : i32
    return %c0_i32, %c0_i32_0 : i32, i32
  }
  func.func @transform_12(%arg0: i32) -> (i32, i32, i32) {
    %c0_i32 = arith.constant 0 : i32
    %c0_i32_0 = arith.constant 0 : i32
    %c0_i32_1 = arith.constant 0 : i32
    return %arg0, %c0_i32, %c0_i32_0 : i32, i32, i32
  }
  func.func @transform_13(%arg0: i32) -> (i32, i32, i32) {
    %c0_i32 = arith.constant 0 : i32
    %c0_i32_0 = arith.constant 0 : i32
    %c0_i32_1 = arith.constant 0 : i32
    return %arg0, %c0_i32, %c0_i32_0 : i32, i32, i32
  }
}

</mosaic_0001>

<llo_original>
// kernel: residual_forward.2
$region0: #{residual_forward.2}
  #allocation0 [shape = 'u32[]', space=smem, size = 0x4, offset = 0x4, fixed_abs, tag = 'smem constant byte address 0x4 - core index']
  #allocation1 [shape = 'u32[72,128]{1,0:T(1,128)}', space=vmem, size = 0x9000, scoped, tag = 'internal scratch']
  %s0 = inlined_call_operand.vmem [shape: f32[2,16,256], index: 0, kind: input, shape index: {}]
  %s1 = inlined_call_operand.vmem [shape: f32[16,1], index: 1, kind: input, shape index: {}]
  %s2 = inlined_call_operand.vmem [shape: f32[16,1], index: 2, kind: input, shape index: {}]
  %s3 = inlined_call_operand.vmem [shape: bf16[9,16], index: 3, kind: input, shape index: {}]
  %s4 = inlined_call_operand.vmem [shape: f32[9,1], index: 4, kind: input, shape index: {}]
  %s5 = inlined_call_operand.vmem [shape: f32[9,1], index: 5, kind: input, shape index: {}]
  %s6 = inlined_call_operand.vmem [shape: f32[16,1], index: 6, kind: input, shape index: {}]
  %s7 = inlined_call_operand.vmem [shape: f32[16,1], index: 7, kind: input, shape index: {}]
  %s8 = inlined_call_operand.vmem [shape: bf16[2,16], index: 8, kind: input, shape index: {}]
  %s9 = inlined_call_operand.vmem [shape: f32[2,1], index: 9, kind: input, shape index: {}]
  %s10 = inlined_call_operand.vmem [shape: f32[2,1], index: 10, kind: input, shape index: {}]
  %s11 = inlined_call_operand.vmem [shape: f32[16,1], index: 11, kind: input, shape index: {}]
  %s12 = inlined_call_operand.vmem [shape: f32[16,1], index: 12, kind: input, shape index: {}]
  %s13 = inlined_call_operand.vmem [shape: bf16[18,16], index: 13, kind: input, shape index: {}]
  %s14 = inlined_call_operand.vmem [shape: f32[18,1], index: 14, kind: input, shape index: {}]
  %s15 = inlined_call_operand.vmem [shape: bf16[2,9,256], index: 15, kind: output, shape index: {0}]
  %s16 = inlined_call_operand.vmem [shape: bf16[2,2,256], index: 16, kind: output, shape index: {1}]
  %s17 = inlined_call_operand.vmem [shape: f32[2,18,256], index: 17, kind: output, shape index: {2}]
  %18 = xla_tuple %s15, %s16, %s17
  %s19 = sld [smem:[#allocation0]]
  $region109: #{residual_forward.2} parent=0
    _
  %s21 = ssub.s32 1, %s19
  %s22 = scalar_select 0, %s21, %s19
  loop: start=0, step=1, limit=4
  $region2: #{residual_forward.2} parent=0 // loop_pre_header
    _
  $region3: #{residual_forward.2} parent=0 // loop_header
    %s24 = sphi 0, %s28
    %p25 = scmp.ge.s32.totalorder %s24, 4
    %s34 = sphi 0, %s36
    %s37 = sphi 0, %s34
    %s38 = sphi 0, %s37
    %s54 = sphi 0, %s38
    %s58 = sphi 0, %s58
    %s60 = sphi 0, %s58
    %s61 = sphi 0, %s60
    %s75 = sphi 0, %s61
    %s79 = sphi 0, %s79
    %s81 = sphi 0, %s79
    %s82 = sphi 0, %s81
    %s96 = sphi 0, %s82
    %s100 = sphi 0, %s100
    %s102 = sphi 0, %s100
    %s103 = sphi 0, %s102
    %s117 = sphi 0, %s103
    %s121 = sphi 0, %s121
    %s123 = sphi 0, %s121
    %s124 = sphi 0, %s123
    %s138 = sphi 0, %s124
    %s142 = sphi 0, %s142
    %s144 = sphi 0, %s142
    %s145 = sphi 0, %s144
    %s159 = sphi 0, %s145
    %s163 = sphi 0, %s163
    %s165 = sphi 0, %s163
    %s166 = sphi 0, %s165
    %s180 = sphi 0, %s166
    %s184 = sphi 0, %s184
    %s186 = sphi 0, %s184
    %s187 = sphi 0, %s186
    %s201 = sphi 0, %s187
    %s205 = sphi 0, %s205
    %s207 = sphi 0, %s205
    %s208 = sphi 0, %s207
    %s222 = sphi 0, %s208
    %s226 = sphi 0, %s226
    %s228 = sphi 0, %s226
    %s229 = sphi 0, %s228
    %s243 = sphi 0, %s229
    %s247 = sphi 0, %s247
    %s249 = sphi 0, %s247
    %s250 = sphi 0, %s249
    %s264 = sphi 0, %s250
    %s268 = sphi 0, %s268
    %s270 = sphi 0, %s268
    %s271 = sphi 0, %s270
    %s285 = sphi 0, %s271
    %s289 = sphi 0, %s289
    %s291 = sphi 0, %s289
    %s292 = sphi 0, %s291
    %s306 = sphi 0, %s292
    %s310 = sphi 0, %s310
    %s312 = sphi 0, %s310
    %s313 = sphi 0, %s312
    %s327 = sphi 0, %s313
    %s331 = sphi 0, %s331
    %s333 = sphi 0, %s331
    %s334 = sphi 0, %s333
    %s348 = sphi 0, %s334
    %s354 = sphi 0, %s356
    %s357 = sphi 0, %s354
    %s358 = sphi 0, %s357
    %s374 = sphi 0, %s358
    %s380 = sphi 0, %s382
    %s383 = sphi 0, %s380
    %s384 = sphi 0, %s383
    %s400 = sphi 0, %s384
    %s406 = sphi 0, %s408
    %s409 = sphi 0, %s406
    %s410 = sphi 0, %s409
    %s426 = sphi 0, %s410
  $region4: #{residual_forward.2} parent=0 // loop_header_branch
    %27 = sbr.rel (%p25) target = $region8
  $region5: #{residual_forward.2} parent=0 // loop_body
    %s29 = ssub.s32 %s24, 1
    %s30 = ssub.s32 %s24, 2
    %s31 = sadd.s32 %s24, 1
    %s32 = ssub.s32 %s24, %s31
    %p33 = scmp.eq.s32.totalorder %s32, 0
    %s35 = sadd.s32 %s34, 1
    %s36 = scalar_select %p33, %s34, %s35
    %p39 = pneg %p33
    %p40 = scmp.eq.s32.totalorder %s24, 1
    %p41 = por %p39, %p40
    %p42 = scmp.ne.s32.totalorder %s34, %s37
    %p43 = scmp.eq.s32.totalorder %s24, 0
    %p44 = por %p42, %p43
    %p45 = scmp.ne.s32.totalorder %s34, %s37
    %p46 = scmp.eq.s32.totalorder %s29, 1
    %p47 = por %p45, %p46
    %p48 = scmp.ne.s32.totalorder %s37, %s38
    %p49 = scmp.eq.s32.totalorder %s29, 0
    %p50 = por %p48, %p49
    %p51 = scmp.ne.s32.totalorder %s37, %s38
    %p52 = scmp.eq.s32.totalorder %s30, 1
    %p53 = por %p51, %p52
    %p55 = scmp.ne.s32.totalorder %s38, %s54
    %p56 = scmp.eq.s32.totalorder %s30, 0
    %p57 = por %p55, %p56
    %s59 = sadd.s32 %s58, 1
    %p62 = scmp.eq.s32.totalorder %s24, 1
    %p63 = scmp.ne.s32.totalorder %s58, %s60
    %p64 = scmp.eq.s32.totalorder %s24, 0
    %p65 = por %p63, %p64
    %p66 = scmp.ne.s32.totalorder %s58, %s60
    %p67 = scmp.eq.s32.totalorder %s29, 1
    %p68 = por %p66, %p67
    %p69 = scmp.ne.s32.totalorder %s60, %s61
    %p70 = scmp.eq.s32.totalorder %s29, 0
    %p71 = por %p69, %p70
    %p72 = scmp.ne.s32.totalorder %s60, %s61
    %p73 = scmp.eq.s32.totalorder %s30, 1
    %p74 = por %p72, %p73
    %p76 = scmp.ne.s32.totalorder %s61, %s75
    %p77 = scmp.eq.s32.totalorder %s30, 0
    %p78 = por %p76, %p77
    %s80 = sadd.s32 %s79, 1
    %p83 = scmp.eq.s32.totalorder %s24, 1
    %p84 = scmp.ne.s32.totalorder %s79, %s81
    %p85 = scmp.eq.s32.totalorder %s24, 0
    %p86 = por %p84, %p85
    %p87 = scmp.ne.s32.totalorder %s79, %s81
    %p88 = scmp.eq.s32.totalorder %s29, 1
    %p89 = por %p87, %p88
    %p90 = scmp.ne.s32.totalorder %s81, %s82
    %p91 = scmp.eq.s32.totalorder %s29, 0
    %p92 = por %p90, %p91
    %p93 = scmp.ne.s32.totalorder %s81, %s82
    %p94 = scmp.eq.s32.totalorder %s30, 1
    %p95 = por %p93, %p94
    %p97 = scmp.ne.s32.totalorder %s82, %s96
    %p98 = scmp.eq.s32.totalorder %s30, 0
    %p99 = por %p97, %p98
    %s101 = sadd.s32 %s100, 1
    %p104 = scmp.eq.s32.totalorder %s24, 1
    %p105 = scmp.ne.s32.totalorder %s100, %s102
    %p106 = scmp.eq.s32.totalorder %s24, 0
    %p107 = por %p105, %p106
    %p108 = scmp.ne.s32.totalorder %s100, %s102
    %p109 = scmp.eq.s32.totalorder %s29, 1
    %p110 = por %p108, %p109
    %p111 = scmp.ne.s32.totalorder %s102, %s103
    %p112 = scmp.eq.s32.totalorder %s29, 0
    %p113 = por %p111, %p112
    %p114 = scmp.ne.s32.totalorder %s102, %s103
    %p115 = scmp.eq.s32.totalorder %s30, 1
    %p116 = por %p114, %p115
    %p118 = scmp.ne.s32.totalorder %s103, %s117
    %p119 = scmp.eq.s32.totalorder %s30, 0
    %p120 = por %p118, %p119
    %s122 = sadd.s32 %s121, 1
    %p125 = scmp.eq.s32.totalorder %s24, 1
    %p126 = scmp.ne.s32.totalorder %s121, %s123
    %p127 = scmp.eq.s32.totalorder %s24, 0
    %p128 = por %p126, %p127
    %p129 = scmp.ne.s32.totalorder %s121, %s123
    %p130 = scmp.eq.s32.totalorder %s29, 1
    %p131 = por %p129, %p130
    %p132 = scmp.ne.s32.totalorder %s123, %s124
    %p133 = scmp.eq.s32.totalorder %s29, 0
    %p134 = por %p132, %p133
    %p135 = scmp.ne.s32.totalorder %s123, %s124
    %p136 = scmp.eq.s32.totalorder %s30, 1
    %p137 = por %p135, %p136
    %p139 = scmp.ne.s32.totalorder %s124, %s138
    %p140 = scmp.eq.s32.totalorder %s30, 0
    %p141 = por %p139, %p140
    %s143 = sadd.s32 %s142, 1
    %p146 = scmp.eq.s32.totalorder %s24, 1
    %p147 = scmp.ne.s32.totalorder %s142, %s144
    %p148 = scmp.eq.s32.totalorder %s24, 0
    %p149 = por %p147, %p148
    %p150 = scmp.ne.s32.totalorder %s142, %s144
    %p151 = scmp.eq.s32.totalorder %s29, 1
    %p152 = por %p150, %p151
    %p153 = scmp.ne.s32.totalorder %s144, %s145
    %p154 = scmp.eq.s32.totalorder %s29, 0
    %p155 = por %p153, %p154
    %p156 = scmp.ne.s32.totalorder %s144, %s145
    %p157 = scmp.eq.s32.totalorder %s30, 1
    %p158 = por %p156, %p157
    %p160 = scmp.ne.s32.totalorder %s145, %s159
    %p161 = scmp.eq.s32.totalorder %s30, 0
    %p162 = por %p160, %p161
    %s164 = sadd.s32 %s163, 1
    %p167 = scmp.eq.s32.totalorder %s24, 1
    %p168 = scmp.ne.s32.totalorder %s163, %s165
    %p169 = scmp.eq.s32.totalorder %s24, 0
    %p170 = por %p168, %p169
    %p171 = scmp.ne.s32.totalorder %s163, %s165
    %p172 = scmp.eq.s32.totalorder %s29, 1
    %p173 = por %p171, %p172
    %p174 = scmp.ne.s32.totalorder %s165, %s166
    %p175 = scmp.eq.s32.totalorder %s29, 0
    %p176 = por %p174, %p175
    %p177 = scmp.ne.s32.totalorder %s165, %s166
    %p178 = scmp.eq.s32.totalorder %s30, 1
    %p179 = por %p177, %p178
    %p181 = scmp.ne.s32.totalorder %s166, %s180
    %p182 = scmp.eq.s32.totalorder %s30, 0
    %p183 = por %p181, %p182
    %s185 = sadd.s32 %s184, 1
    %p188 = scmp.eq.s32.totalorder %s24, 1
    %p189 = scmp.ne.s32.totalorder %s184, %s186
    %p190 = scmp.eq.s32.totalorder %s24, 0
    %p191 = por %p189, %p190
    %p192 = scmp.ne.s32.totalorder %s184, %s186
    %p193 = scmp.eq.s32.totalorder %s29, 1
    %p194 = por %p192, %p193
    %p195 = scmp.ne.s32.totalorder %s186, %s187
    %p196 = scmp.eq.s32.totalorder %s29, 0
    %p197 = por %p195, %p196
    %p198 = scmp.ne.s32.totalorder %s186, %s187
    %p199 = scmp.eq.s32.totalorder %s30, 1
    %p200 = por %p198, %p199
    %p202 = scmp.ne.s32.totalorder %s187, %s201
    %p203 = scmp.eq.s32.totalorder %s30, 0
    %p204 = por %p202, %p203
    %s206 = sadd.s32 %s205, 1
    %p209 = scmp.eq.s32.totalorder %s24, 1
    %p210 = scmp.ne.s32.totalorder %s205, %s207
    %p211 = scmp.eq.s32.totalorder %s24, 0
    %p212 = por %p210, %p211
    %p213 = scmp.ne.s32.totalorder %s205, %s207
    %p214 = scmp.eq.s32.totalorder %s29, 1
    %p215 = por %p213, %p214
    %p216 = scmp.ne.s32.totalorder %s207, %s208
    %p217 = scmp.eq.s32.totalorder %s29, 0
    %p218 = por %p216, %p217
    %p219 = scmp.ne.s32.totalorder %s207, %s208
    %p220 = scmp.eq.s32.totalorder %s30, 1
    %p221 = por %p219, %p220
    %p223 = scmp.ne.s32.totalorder %s208, %s222
    %p224 = scmp.eq.s32.totalorder %s30, 0
    %p225 = por %p223, %p224
    %s227 = sadd.s32 %s226, 1
    %p230 = scmp.eq.s32.totalorder %s24, 1
    %p231 = scmp.ne.s32.totalorder %s226, %s228
    %p232 = scmp.eq.s32.totalorder %s24, 0
    %p233 = por %p231, %p232
    %p234 = scmp.ne.s32.totalorder %s226, %s228
    %p235 = scmp.eq.s32.totalorder %s29, 1
    %p236 = por %p234, %p235
    %p237 = scmp.ne.s32.totalorder %s228, %s229
    %p238 = scmp.eq.s32.totalorder %s29, 0
    %p239 = por %p237, %p238
    %p240 = scmp.ne.s32.totalorder %s228, %s229
    %p241 = scmp.eq.s32.totalorder %s30, 1
    %p242 = por %p240, %p241
    %p244 = scmp.ne.s32.totalorder %s229, %s243
    %p245 = scmp.eq.s32.totalorder %s30, 0
    %p246 = por %p244, %p245
    %s248 = sadd.s32 %s247, 1
    %p251 = scmp.eq.s32.totalorder %s24, 1
    %p252 = scmp.ne.s32.totalorder %s247, %s249
    %p253 = scmp.eq.s32.totalorder %s24, 0
    %p254 = por %p252, %p253
    %p255 = scmp.ne.s32.totalorder %s247, %s249
    %p256 = scmp.eq.s32.totalorder %s29, 1
    %p257 = por %p255, %p256
    %p258 = scmp.ne.s32.totalorder %s249, %s250
    %p259 = scmp.eq.s32.totalorder %s29, 0
    %p260 = por %p258, %p259
    %p261 = scmp.ne.s32.totalorder %s249, %s250
    %p262 = scmp.eq.s32.totalorder %s30, 1
    %p263 = por %p261, %p262
    %p265 = scmp.ne.s32.totalorder %s250, %s264
    %p266 = scmp.eq.s32.totalorder %s30, 0
    %p267 = por %p265, %p266
    %s269 = sadd.s32 %s268, 1
    %p272 = scmp.eq.s32.totalorder %s24, 1
    %p273 = scmp.ne.s32.totalorder %s268, %s270
    %p274 = scmp.eq.s32.totalorder %s24, 0
    %p275 = por %p273, %p274
    %p276 = scmp.ne.s32.totalorder %s268, %s270
    %p277 = scmp.eq.s32.totalorder %s29, 1
    %p278 = por %p276, %p277
    %p279 = scmp.ne.s32.totalorder %s270, %s271
    %p280 = scmp.eq.s32.totalorder %s29, 0
    %p281 = por %p279, %p280
    %p282 = scmp.ne.s32.totalorder %s270, %s271
    %p283 = scmp.eq.s32.totalorder %s30, 1
    %p284 = por %p282, %p283
    %p286 = scmp.ne.s32.totalorder %s271, %s285
    %p287 = scmp.eq.s32.totalorder %s30, 0
    %p288 = por %p286, %p287
    %s290 = sadd.s32 %s289, 1
    %p293 = scmp.eq.s32.totalorder %s24, 1
    %p294 = scmp.ne.s32.totalorder %s289, %s291
    %p295 = scmp.eq.s32.totalorder %s24, 0
    %p296 = por %p294, %p295
    %p297 = scmp.ne.s32.totalorder %s289, %s291
    %p298 = scmp.eq.s32.totalorder %s29, 1
    %p299 = por %p297, %p298
    %p300 = scmp.ne.s32.totalorder %s291, %s292
    %p301 = scmp.eq.s32.totalorder %s29, 0
    %p302 = por %p300, %p301
    %p303 = scmp.ne.s32.totalorder %s291, %s292
    %p304 = scmp.eq.s32.totalorder %s30, 1
    %p305 = por %p303, %p304
    %p307 = scmp.ne.s32.totalorder %s292, %s306
    %p308 = scmp.eq.s32.totalorder %s30, 0
    %p309 = por %p307, %p308
    %s311 = sadd.s32 %s310, 1
    %p314 = scmp.eq.s32.totalorder %s24, 1
    %p315 = scmp.ne.s32.totalorder %s310, %s312
    %p316 = scmp.eq.s32.totalorder %s24, 0
    %p317 = por %p315, %p316
    %p318 = scmp.ne.s32.totalorder %s310, %s312
    %p319 = scmp.eq.s32.totalorder %s29, 1
    %p320 = por %p318, %p319
    %p321 = scmp.ne.s32.totalorder %s312, %s313
    %p322 = scmp.eq.s32.totalorder %s29, 0
    %p323 = por %p321, %p322
    %p324 = scmp.ne.s32.totalorder %s312, %s313
    %p325 = scmp.eq.s32.totalorder %s30, 1
    %p326 = por %p324, %p325
    %p328 = scmp.ne.s32.totalorder %s313, %s327
    %p329 = scmp.eq.s32.totalorder %s30, 0
    %p330 = por %p328, %p329
    %s332 = sadd.s32 %s331, 1
    %p335 = scmp.eq.s32.totalorder %s24, 1
    %p336 = scmp.ne.s32.totalorder %s331, %s333
    %p337 = scmp.eq.s32.totalorder %s24, 0
    %p338 = por %p336, %p337
    %p339 = scmp.ne.s32.totalorder %s331, %s333
    %p340 = scmp.eq.s32.totalorder %s29, 1
    %p341 = por %p339, %p340
    %p342 = scmp.ne.s32.totalorder %s333, %s334
    %p343 = scmp.eq.s32.totalorder %s29, 0
    %p344 = por %p342, %p343
    %p345 = scmp.ne.s32.totalorder %s333, %s334
    %p346 = scmp.eq.s32.totalorder %s30, 1
    %p347 = por %p345, %p346
    %p349 = scmp.ne.s32.totalorder %s334, %s348
    %p350 = scmp.eq.s32.totalorder %s30, 0
    %p351 = por %p349, %p350
    %s352 = ssub.s32 %s24, %s31
    %p353 = scmp.eq.s32.totalorder %s352, 0
    %s355 = sadd.s32 %s354, 1
    %s356 = scalar_select %p353, %s354, %s355
    %p359 = pneg %p353
    %p360 = scmp.eq.s32.totalorder %s24, 1
    %p361 = por %p359, %p360
    %p362 = scmp.ne.s32.totalorder %s354, %s357
    %p363 = scmp.eq.s32.totalorder %s24, 0
    %p364 = por %p362, %p363
    %p365 = scmp.ne.s32.totalorder %s354, %s357
    %p366 = scmp.eq.s32.totalorder %s29, 1
    %p367 = por %p365, %p366
    %p368 = scmp.ne.s32.totalorder %s357, %s358
    %p369 = scmp.eq.s32.totalorder %s29, 0
    %p370 = por %p368, %p369
    %p371 = scmp.ne.s32.totalorder %s357, %s358
    %p372 = scmp.eq.s32.totalorder %s30, 1
    %p373 = por %p371, %p372
    %p375 = scmp.ne.s32.totalorder %s358, %s374
    %p376 = scmp.eq.s32.totalorder %s30, 0
    %p377 = por %p375, %p376
    %s378 = ssub.s32 %s24, %s31
    %p379 = scmp.eq.s32.totalorder %s378, 0
    %s381 = sadd.s32 %s380, 1
    %s382 = scalar_select %p379, %s380, %s381
    %p385 = pneg %p379
    %p386 = scmp.eq.s32.totalorder %s24, 1
    %p387 = por %p385, %p386
    %p388 = scmp.ne.s32.totalorder %s380, %s383
    %p389 = scmp.eq.s32.totalorder %s24, 0
    %p390 = por %p388, %p389
    %p391 = scmp.ne.s32.totalorder %s380, %s383
    %p392 = scmp.eq.s32.totalorder %s29, 1
    %p393 = por %p391, %p392
    %p394 = scmp.ne.s32.totalorder %s383, %s384
    %p395 = scmp.eq.s32.totalorder %s29, 0
    %p396 = por %p394, %p395
    %p397 = scmp.ne.s32.totalorder %s383, %s384
    %p398 = scmp.eq.s32.totalorder %s30, 1
    %p399 = por %p397, %p398
    %p401 = scmp.ne.s32.totalorder %s384, %s400
    %p402 = scmp.eq.s32.totalorder %s30, 0
    %p403 = por %p401, %p402
    %s404 = ssub.s32 %s24, %s31
    %p405 = scmp.eq.s32.totalorder %s404, 0
    %s407 = sadd.s32 %s406, 1
    %s408 = scalar_select %p405, %s406, %s407
    %p411 = pneg %p405
    %p412 = scmp.eq.s32.totalorder %s24, 1
    %p413 = por %p411, %p412
    %p414 = scmp.ne.s32.totalorder %s406, %s409
    %p415 = scmp.eq.s32.totalorder %s24, 0
    %p416 = por %p414, %p415
    %p417 = scmp.ne.s32.totalorder %s406, %s409
    %p418 = scmp.eq.s32.totalorder %s29, 1
    %p419 = por %p417, %p418
    %p420 = scmp.ne.s32.totalorder %s409, %s410
    %p421 = scmp.eq.s32.totalorder %s29, 0
    %p422 = por %p420, %p421
    %p423 = scmp.ne.s32.totalorder %s409, %s410
    %p424 = scmp.eq.s32.totalorder %s30, 1
    %p425 = por %p423, %p424
    %p427 = scmp.ne.s32.totalorder %s410, %s426
    %p428 = scmp.eq.s32.totalorder %s30, 0
    %p429 = por %p427, %p428
    %p430 = scmp.le.s32.totalorder 1, %s24
    %p431 = scmp.lt.s32.totalorder %s24, 3
    %p432 = pnand %p430, %p431
    %p433 = pneg %p432
    // Predicated region
    $region9: #{residual_forward.2} parent=5 // pred_check
      _
    $region10: #{residual_forward.2} parent=5 // pred_check_branch
      %435 = sbr.rel (%p432) target = $region12
    $region11: #{residual_forward.2} parent=5 // pred_region
      %s436 = ssub.s32 %s24, 1
      // Predicated region
      $region13: #{residual_forward.2} parent=11 // pred_check
        %p437 = pneg %p71
      $region14: #{residual_forward.2} parent=11 // pred_check_branch
        %439 = sbr.rel (%p437) target = $region16
      $region15: #{residual_forward.2} parent=11 // pred_region
        _
      $region16: #{residual_forward.2} parent=11 // pred_fallthru
        _
      // Predicated region
      $region17: #{residual_forward.2} parent=11 // pred_check
        %p440 = pneg %p92
      $region18: #{residual_forward.2} parent=11 // pred_check_branch
        %442 = sbr.rel (%p440) target = $region20
      $region19: #{residual_forward.2} parent=11 // pred_region
        _
      $region20: #{residual_forward.2} parent=11 // pred_fallthru
        _
      // Predicated region
      $region21: #{residual_forward.2} parent=11 // pred_check
        %p443 = pneg %p113
      $region22: #{residual_forward.2} parent=11 // pred_check_branch
        %445 = sbr.rel (%p443) target = $region24
      $region23: #{residual_forward.2} parent=11 // pred_region
        _
      $region24: #{residual_forward.2} parent=11 // pred_fallthru
        _
      // Predicated region
      $region25: #{residual_forward.2} parent=11 // pred_check
        %p446 = pneg %p134
      $region26: #{residual_forward.2} parent=11 // pred_check_branch
        %448 = sbr.rel (%p446) target = $region28
      $region27: #{residual_forward.2} parent=11 // pred_region
        _
      $region28: #{residual_forward.2} parent=11 // pred_fallthru
        _
      // Predicated region
      $region29: #{residual_forward.2} parent=11 // pred_check
        %p449 = pneg %p155
      $region30: #{residual_forward.2} parent=11 // pred_check_branch
        %451 = sbr.rel (%p449) target = $region32
      $region31: #{residual_forward.2} parent=11 // pred_region
        _
      $region32: #{residual_forward.2} parent=11 // pred_fallthru
        _
      // Predicated region
      $region33: #{residual_forward.2} parent=11 // pred_check
        %p452 = pneg %p176
      $region34: #{residual_forward.2} parent=11 // pred_check_branch
        %454 = sbr.rel (%p452) target = $region36
      $region35: #{residual_forward.2} parent=11 // pred_region
        _
      $region36: #{residual_forward.2} parent=11 // pred_fallthru
        _
      // Predicated region
      $region37: #{residual_forward.2} parent=11 // pred_check
        %p455 = pneg %p197
      $region38: #{residual_forward.2} parent=11 // pred_check_branch
        %457 = sbr.rel (%p455) target = $region40
      $region39: #{residual_forward.2} parent=11 // pred_region
        _
      $region40: #{residual_forward.2} parent=11 // pred_fallthru
        _
      // Predicated region
      $region41: #{residual_forward.2} parent=11 // pred_check
        %p458 = pneg %p218
      $region42: #{residual_forward.2} parent=11 // pred_check_branch
        %460 = sbr.rel (%p458) target = $region44
      $region43: #{residual_forward.2} parent=11 // pred_region
        _
      $region44: #{residual_forward.2} parent=11 // pred_fallthru
        _
      // Predicated region
      $region45: #{residual_forward.2} parent=11 // pred_check
        %p461 = pneg %p239
      $region46: #{residual_forward.2} parent=11 // pred_check_branch
        %463 = sbr.rel (%p461) target = $region48
      $region47: #{residual_forward.2} parent=11 // pred_region
        _
      $region48: #{residual_forward.2} parent=11 // pred_fallthru
        _
      // Predicated region
      $region49: #{residual_forward.2} parent=11 // pred_check
        %p464 = pneg %p260
      $region50: #{residual_forward.2} parent=11 // pred_check_branch
        %466 = sbr.rel (%p464) target = $region52
      $region51: #{residual_forward.2} parent=11 // pred_region
        _
      $region52: #{residual_forward.2} parent=11 // pred_fallthru
        _
      // Predicated region
      $region53: #{residual_forward.2} parent=11 // pred_check
        %p467 = pneg %p281
      $region54: #{residual_forward.2} parent=11 // pred_check_branch
        %469 = sbr.rel (%p467) target = $region56
      $region55: #{residual_forward.2} parent=11 // pred_region
        _
      $region56: #{residual_forward.2} parent=11 // pred_fallthru
        _
      // Predicated region
      $region57: #{residual_forward.2} parent=11 // pred_check
        %p470 = pneg %p302
      $region58: #{residual_forward.2} parent=11 // pred_check_branch
        %472 = sbr.rel (%p470) target = $region60
      $region59: #{residual_forward.2} parent=11 // pred_region
        _
      $region60: #{residual_forward.2} parent=11 // pred_fallthru
        _
      // Predicated region
      $region61: #{residual_forward.2} parent=11 // pred_check
        %p473 = pneg %p323
      $region62: #{residual_forward.2} parent=11 // pred_check_branch
        %475 = sbr.rel (%p473) target = $region64
      $region63: #{residual_forward.2} parent=11 // pred_region
        _
      $region64: #{residual_forward.2} parent=11 // pred_fallthru
        _
      // Predicated region
      $region65: #{residual_forward.2} parent=11 // pred_check
        %p476 = pneg %p344
      $region66: #{residual_forward.2} parent=11 // pred_check_branch
        %478 = sbr.rel (%p476) target = $region68
      $region67: #{residual_forward.2} parent=11 // pred_region
        _
      $region68: #{residual_forward.2} parent=11 // pred_fallthru
        _
    $region12: #{residual_forward.2} parent=5 // pred_fallthru
      _
    %p479 = scmp.lt.s32.totalorder %s24, 2
    // Predicated region
    $region69: #{residual_forward.2} parent=5 // pred_check
      %p480 = pneg %p479
    $region70: #{residual_forward.2} parent=5 // pred_check_branch
      %482 = sbr.rel (%p480) target = $region72
    $region71: #{residual_forward.2} parent=5 // pred_region
      // Predicated region
      $region73: #{residual_forward.2} parent=71 // pred_check
        %p483 = pneg %p44
      $region74: #{residual_forward.2} parent=71 // pred_check_branch
        %485 = sbr.rel (%p483) target = $region76
      $region75: #{residual_forward.2} parent=71 // pred_region
        %p486 = scmp.lt.s32.totalorder %s24, 1
        %s487 = scalar_select %p486, %s24, 1
        %s488 = smul.addr %s487, 4
        %s489 = smul.addr %s488, 8
        %s490 = scalar_lea.vmem %s0, %s489
      $region76: #{residual_forward.2} parent=71 // pred_fallthru
        _
    $region72: #{residual_forward.2} parent=5 // pred_fallthru
      _
    %p491 = scmp.le.s32.totalorder 1, %s24
    %p492 = scmp.lt.s32.totalorder %s24, 3
    %p493 = pnand %p491, %p492
    %p494 = pneg %p493
    // Predicated region
    $region77: #{residual_forward.2} parent=5 // pred_check
      _
    $region78: #{residual_forward.2} parent=5 // pred_check_branch
      %496 = sbr.rel (%p493) target = $region80
    $region79: #{residual_forward.2} parent=5 // pred_region
      %s497 = ssub.s32 %s24, 1
      %p498 = scmp.lt.s32.totalorder %s29, 1
      %s499 = scalar_select %p498, %s29, 1
      %s500 = smul.addr %s499, 4
      %s501 = smul.addr %s500, 8
      %s502 = scalar_lea.vmem %s0, %s501
      %p503 = pneg %p50
      %p504 = pneg %p47
      %p505 = pneg %p71
      %p506 = pneg %p68
      %p507 = pneg %p92
      %p508 = pneg %p89
      %p509 = pneg %p113
      %p510 = pneg %p110
      %p511 = pneg %p134
      %p512 = pneg %p131
      %p513 = pneg %p155
      %p514 = pneg %p152
      %p515 = pneg %p176
      %p516 = pneg %p173
      %p517 = pneg %p197
      %p518 = pneg %p194
      %p519 = pneg %p218
      %p520 = pneg %p215
      %p521 = pneg %p239
      %p522 = pneg %p236
      %p523 = pneg %p260
      %p524 = pneg %p257
      %p525 = pneg %p281
      %p526 = pneg %p278
      %p527 = pneg %p302
      %p528 = pneg %p299
      %p529 = pneg %p323
      %p530 = pneg %p320
      %p531 = pneg %p344
      %p532 = pneg %p341
      %p533 = pneg %p370
      %p534 = pneg %p367
      %p535 = scmp.lt.s32.totalorder %s29, 1
      %s536 = scalar_select %p535, %s29, 1
      %s537 = smul.addr %s536, 4
      %s538 = smul.addr %s537, 4
      %s539 = scalar_lea.vmem %s15, %s538
      %p540 = pneg %p396
      %p541 = pneg %p393
      %p542 = scmp.lt.s32.totalorder %s29, 1
      %s543 = scalar_select %p542, %s29, 1
      %s544 = smul.addr %s543, 2
      %s545 = scalar_lea.vmem %s16, %s544
      %p546 = pneg %p422
      %p547 = pneg %p419
      %p548 = scmp.lt.s32.totalorder %s29, 1
      %s549 = scalar_select %p548, %s29, 1
      %s550 = smul.addr %s549, 6
      %s551 = smul.addr %s550, 8
      %s552 = scalar_lea.vmem %s17, %s551
      %p553 = scmp.lt.s32.totalorder %s29, 1
      %s554 = scalar_select %p553, %s29, 1
      %s555 = smul.addr %s554, 4
      %s556 = smul.addr %s555, 8
      %s557 = scalar_lea.vmem %s0, %s556
      %p558 = scmp.lt.s32.totalorder %s29, 1
      %s559 = scalar_select %p558, %s29, 1
      %s560 = smul.addr %s559, 4
      %s561 = smul.addr %s560, 4
      %s562 = scalar_lea.vmem %s15, %s561
      %p563 = scmp.lt.s32.totalorder %s29, 1
      %s564 = scalar_select %p563, %s29, 1
      %s565 = smul.addr %s564, 2
      %s566 = scalar_lea.vmem %s16, %s565
      %p567 = scmp.lt.s32.totalorder %s29, 1
      %s568 = scalar_select %p567, %s29, 1
      %s569 = smul.addr %s568, 6
      %s570 = smul.addr %s569, 8
      %s571 = scalar_lea.vmem %s17, %s570
      %v573 = vld [vmem:[%s557] sm:$0xff]
      %v574 = vld [vmem:[%s557 + $0x8] sm:$0xff]
      %v575 = vld [vmem:[%s557 + $0x10] sm:$0xff]
      %v576 = vld [vmem:[%s557 + $0x18] sm:$0xff]
      %v577 = vld [vmem:[%s1] sm:$0xff]
      %v578 = vld [vmem:[%s1 + $0x8] sm:$0xff]
      %580 = vset.pattern.permute.xlu0 0
      %581 = vperm.xlu0 %580, %v577
      %v582 = vpop.permute.xlu0 %581
      %585 = vset.pattern.permute.xlu0 0
      %586 = vperm.xlu0 %585, %v578
      %v587 = vpop.permute.xlu0 %586
      %v589 = vmul.f32 %v573, %v582
      %v590 = vmul.f32 %v574, %v582
      %v591 = vmul.f32 %v575, %v587
      %v592 = vmul.f32 %v576, %v587
      %v593 = vld [vmem:[%s2] sm:$0xff]
      %v594 = vld [vmem:[%s2 + $0x8] sm:$0xff]
      %596 = vset.pattern.permute.xlu0 0
      %597 = vperm.xlu0 %596, %v593
      %v598 = vpop.permute.xlu0 %597
      %601 = vset.pattern.permute.xlu0 0
      %602 = vperm.xlu0 %601, %v594
      %v603 = vpop.permute.xlu0 %602
      %v605 = vadd.f32 %v589, %v598
      %v606 = vadd.f32 %v590, %v598
      %v607 = vadd.f32 %v591, %v603
      %v608 = vadd.f32 %v592, %v603
      %v609 = vmax.f32 %v605, 0.0
      %v610 = vmax.f32 %v606, 0.0
      %v611 = vmax.f32 %v607, 0.0
      %v612 = vmax.f32 %v608, 0.0
      %v613 = vpack.c.bf16 %v611, %v609
      %v614 = vpack.c.bf16 %v612, %v610
      %v615 = vld [vmem:[%s3] sm:$0xf]
      %v616 = vld [vmem:[%s3 + $0x4] sm:$0x1]
      %v619 = vunpack.c.l.b16 %v615
      %v620 = vunpack.c.l.b16 %v616
      %v621 = vpack.c.b16 %v620, %v619
      %vm622 = vcmask 130048
      %v624 = vsel %vm622, %v621, 0
      %626 = vmatpush.bf16.msra.mxu0 0
      %627 = vmatpush.bf16.msra.mxu0 0
      %628 = vmatpush.bf16.msra.mxu0 0
      %629 = vmatpush.bf16.msra.mxu0 0
      %630 = vmatpush.bf16.msra.mxu0 0
      %631 = vmatpush.bf16.msra.mxu0 0
      %632 = vmatpush.bf16.msra.mxu0 0
      %633 = vmatpush.bf16.msra.mxu0 %v613
      %634 = vmatmul.bf16.gmra.mxu0 %v624
      %v635 = vpop.f32.mrf.mxu0
      %v636 = vadd.f32 0.0, %v635
      %v637 = vpop.f32.mrf.mxu0
      %v638 = vadd.f32 0.0, %v637
      %639 = vdwg.mxu0
      %640 = vmatpush.bf16.msra.mxu0 0
      %641 = vmatpush.bf16.msra.mxu0 0
      %642 = vmatpush.bf16.msra.mxu0 0
      %643 = vmatpush.bf16.msra.mxu0 0
      %644 = vmatpush.bf16.msra.mxu0 0
      %645 = vmatpush.bf16.msra.mxu0 0
      %646 = vmatpush.bf16.msra.mxu0 0
      %647 = vmatpush.bf16.msra.mxu0 %v614
      %648 = vmatmul.bf16.gmra.mxu0 %v624
      %v649 = vpop.f32.mrf.mxu0
      %v650 = vadd.f32 0.0, %v649
      %v651 = vpop.f32.mrf.mxu0
      %v652 = vadd.f32 0.0, %v651
      %653 = vdwg.mxu0
      %v654 = vld [vmem:[%s4] sm:$0xff]
      %v655 = vld [vmem:[%s4 + $0x8] sm:$0x1]
      %657 = vset.pattern.permute.xlu0 0
      %658 = vperm.xlu0 %657, %v654
      %v659 = vpop.permute.xlu0 %658
      %662 = vset.pattern.permute.xlu0 0
      %663 = vperm.xlu0 %662, %v655
      %v664 = vpop.permute.xlu0 %663
      %v666 = vmul.f32 %v636, %v659
      %v667 = vmul.f32 %v650, %v659
      %v668 = vmul.f32 %v638, %v664
      %v669 = vmul.f32 %v652, %v664
      %v670 = vld [vmem:[%s5] sm:$0xff]
      %v671 = vld [vmem:[%s5 + $0x8] sm:$0x1]
      %673 = vset.pattern.permute.xlu0 0
      %674 = vperm.xlu0 %673, %v670
      %v675 = vpop.permute.xlu0 %674
      %678 = vset.pattern.permute.xlu0 0
      %679 = vperm.xlu0 %678, %v671
      %v680 = vpop.permute.xlu0 %679
      %v682 = vadd.f32 %v666, %v675
      %v683 = vadd.f32 %v667, %v675
      %v684 = vadd.f32 %v668, %v680
      %v685 = vadd.f32 %v669, %v680
      %v686 = vmax.f32 %v682, 0.0
      %v687 = vmax.f32 %v683, 0.0
      %v688 = vmax.f32 %v684, 0.0
      %v689 = vmax.f32 %v685, 0.0
      %v690 = vpack.c.bf16 %v687, %v686
      %v691 = vpack.c.bf16 %v689, %v688
      %692 = vst [vmem:[%s562] sm:$0xff] %v690
      %vm693 = vcmask 1040384
      %vm694 = vsmask.f32 256
      %vm695 = vmand %vm693, %vm694
      %vm696 = vcmask 1044484
      %vm697 = vsmask.f32 4352
      %vm698 = vmand %vm696, %vm697
      %vm699 = vmor %vm698, %vm695
      %v700 = vld [vmem:[%s562 + $0x8] sm:$0x11]
      %v701 = vsel %vm699, %v691, %v700
      %702 = vst [vmem:[%s562 + $0x8] sm:$0x11] %v701
      %v703 = vld [vmem:[%s6] sm:$0xff]
      %v704 = vld [vmem:[%s6 + $0x8] sm:$0xff]
      %706 = vset.pattern.permute.xlu0 0
      %707 = vperm.xlu0 %706, %v703
      %v708 = vpop.permute.xlu0 %707
      %711 = vset.pattern.permute.xlu0 0
      %712 = vperm.xlu0 %711, %v704
      %v713 = vpop.permute.xlu0 %712
      %v715 = vmul.f32 %v573, %v708
      %v716 = vmul.f32 %v574, %v708
      %v717 = vmul.f32 %v575, %v713
      %v718 = vmul.f32 %v576, %v713
      %v719 = vld [vmem:[%s7] sm:$0xff]
      %v720 = vld [vmem:[%s7 + $0x8] sm:$0xff]
      %722 = vset.pattern.permute.xlu0 0
      %723 = vperm.xlu0 %722, %v719
      %v724 = vpop.permute.xlu0 %723
      %727 = vset.pattern.permute.xlu0 0
      %728 = vperm.xlu0 %727, %v720
      %v729 = vpop.permute.xlu0 %728
      %v731 = vadd.f32 %v715, %v724
      %v732 = vadd.f32 %v716, %v724
      %v733 = vadd.f32 %v717, %v729
      %v734 = vadd.f32 %v718, %v729
      %v735 = vmax.f32 %v731, 0.0
      %v736 = vmax.f32 %v732, 0.0
      %v737 = vmax.f32 %v733, 0.0
      %v738 = vmax.f32 %v734, 0.0
      %v739 = vpack.c.bf16 %v737, %v735
      %v740 = vpack.c.bf16 %v738, %v736
      %v741 = vld [vmem:[%s8] sm:$0x1]
      %v743 = vsel %vm622, %v741, 0
      %745 = vmatpush.bf16.msra.mxu0 0
      %746 = vmatpush.bf16.msra.mxu0 0
      %747 = vmatpush.bf16.msra.mxu0 0
      %748 = vmatpush.bf16.msra.mxu0 0
      %749 = vmatpush.bf16.msra.mxu0 0
      %750 = vmatpush.bf16.msra.mxu0 0
      %751 = vmatpush.bf16.msra.mxu0 0
      %752 = vmatpush.bf16.msra.mxu0 %v739
      %753 = vmatmul.bf16.gmra.mxu0 %v743
      %v754 = vpop.f32.mrf.mxu0
      %v755 = vadd.f32 0.0, %v754
      %v756 = vpop.f32.mrf.mxu0
      %757 = vdwg.mxu0
      %758 = vmatpush.bf16.msra.mxu0 0
      %759 = vmatpush.bf16.msra.mxu0 0
      %760 = vmatpush.bf16.msra.mxu0 0
      %761 = vmatpush.bf16.msra.mxu0 0
      %762 = vmatpush.bf16.msra.mxu0 0
      %763 = vmatpush.bf16.msra.mxu0 0
      %764 = vmatpush.bf16.msra.mxu0 0
      %765 = vmatpush.bf16.msra.mxu0 %v740
      %766 = vmatmul.bf16.gmra.mxu0 %v743
      %v767 = vpop.f32.mrf.mxu0
      %v768 = vadd.f32 0.0, %v767
      %v769 = vpop.f32.mrf.mxu0
      %770 = vdwg.mxu0
      %v771 = vld [vmem:[%s9] sm:$0x3]
      %773 = vset.pattern.permute.xlu0 0
      %774 = vperm.xlu0 %773, %v771
      %v775 = vpop.permute.xlu0 %774
      %v777 = vmul.f32 %v755, %v775
      %v778 = vmul.f32 %v768, %v775
      %v779 = vld [vmem:[%s10] sm:$0x3]
      %781 = vset.pattern.permute.xlu0 0
      %782 = vperm.xlu0 %781, %v779
      %v783 = vpop.permute.xlu0 %782
      %v785 = vadd.f32 %v777, %v783
      %v786 = vadd.f32 %v778, %v783
      %v787 = vmax.f32 %v785, 0.0
      %v788 = vmax.f32 %v786, 0.0
      %v789 = vpack.c.bf16 %v788, %v787
      %v791 = vrot.slane %v789, 3
      %vm792 = vcmask 1040384
      %v795 = vsel %vm792, %v789, %v791
      %797 = vst [vmem:[%s566] sm:$0x3] %v795
      %v798 = vld [vmem:[%s11] sm:$0xff]
      %v799 = vld [vmem:[%s11 + $0x8] sm:$0xff]
      %801 = vset.pattern.permute.xlu0 0
      %802 = vperm.xlu0 %801, %v798
      %v803 = vpop.permute.xlu0 %802
      %806 = vset.pattern.permute.xlu0 0
      %807 = vperm.xlu0 %806, %v799
      %v808 = vpop.permute.xlu0 %807
      %v810 = vmul.f32 %v573, %v803
      %v811 = vmul.f32 %v574, %v803
      %v812 = vmul.f32 %v575, %v808
      %v813 = vmul.f32 %v576, %v808
      %v814 = vld [vmem:[%s12] sm:$0xff]
      %v815 = vld [vmem:[%s12 + $0x8] sm:$0xff]
      %817 = vset.pattern.permute.xlu0 0
      %818 = vperm.xlu0 %817, %v814
      %v819 = vpop.permute.xlu0 %818
      %822 = vset.pattern.permute.xlu0 0
      %823 = vperm.xlu0 %822, %v815
      %v824 = vpop.permute.xlu0 %823
      %v826 = vadd.f32 %v810, %v819
      %v827 = vadd.f32 %v811, %v819
      %v828 = vadd.f32 %v812, %v824
      %v829 = vadd.f32 %v813, %v824
      %v830 = vmax.f32 %v826, 0.0
      %v831 = vmax.f32 %v827, 0.0
      %v832 = vmax.f32 %v828, 0.0
      %v833 = vmax.f32 %v829, 0.0
      %v834 = vpack.c.bf16 %v832, %v830
      %v835 = vpack.c.bf16 %v833, %v831
      %v836 = vld [vmem:[%s13] sm:$0xf]
      %v837 = vld [vmem:[%s13 + $0x4] sm:$0xf]
      %v838 = vld [vmem:[%s13 + $0x8] sm:$0x1]
      %v839 = vld [vmem:[%s14] sm:$0xff]
      %v840 = vld [vmem:[%s14 + $0x8] sm:$0xff]
      %v841 = vld [vmem:[%s14 + $0x10] sm:$0x3]
      %843 = vset.pattern.permute.xlu0 0
      %844 = vperm.xlu0 %843, %v839
      %v845 = vpop.permute.xlu0 %844
      %848 = vset.pattern.permute.xlu0 0
      %849 = vperm.xlu0 %848, %v840
      %v850 = vpop.permute.xlu0 %849
      %853 = vset.pattern.permute.xlu0 0
      %854 = vperm.xlu0 %853, %v841
      %v855 = vpop.permute.xlu0 %854
      %v860 = vunpack.c.l.b16 %v836
      %v861 = vunpack.c.l.b16 %v837
      %v862 = vunpack.c.l.b16 %v838
      %v863 = vpack.c.b16 %v861, %v860
      %v864 = vpack.c.b16 %v862, %v862
      %v866 = vsel %vm622, %v863, 0
      %v869 = vsel %vm622, %v864, 0
      %871 = vmatpush.bf16.msra.mxu0 0
      %872 = vmatpush.bf16.msra.mxu0 0
      %873 = vmatpush.bf16.msra.mxu0 0
      %874 = vmatpush.bf16.msra.mxu0 0
      %875 = vmatpush.bf16.msra.mxu0 0
      %876 = vmatpush.bf16.msra.mxu0 0
      %877 = vmatpush.bf16.msra.mxu0 0
      %878 = vmatpush.bf16.msra.mxu0 %v834
      %879 = vmatmul.bf16.gmra.mxu0 %v866
      %v880 = vpop.f32.mrf.mxu0
      %v881 = vadd.f32 %v845, %v880
      %v882 = vpop.f32.mrf.mxu0
      %v883 = vadd.f32 %v850, %v882
      %884 = vmatmul.bf16.gmra.mxu0 %v869
      %v885 = vpop.f32.mrf.mxu0
      %v886 = vadd.f32 %v855, %v885
      %v887 = vpop.f32.mrf.mxu0
      %888 = vdwg.mxu0
      %889 = vmatpush.bf16.msra.mxu0 0
      %890 = vmatpush.bf16.msra.mxu0 0
      %891 = vmatpush.bf16.msra.mxu0 0
      %892 = vmatpush.bf16.msra.mxu0 0
      %893 = vmatpush.bf16.msra.mxu0 0
      %894 = vmatpush.bf16.msra.mxu0 0
      %895 = vmatpush.bf16.msra.mxu0 0
      %896 = vmatpush.bf16.msra.mxu0 %v835
      %897 = vmatmul.bf16.gmra.mxu0 %v866
      %v898 = vpop.f32.mrf.mxu0
      %v899 = vadd.f32 %v845, %v898
      %v900 = vpop.f32.mrf.mxu0
      %v901 = vadd.f32 %v850, %v900
      %902 = vmatmul.bf16.gmra.mxu0 %v869
      %v903 = vpop.f32.mrf.mxu0
      %v904 = vadd.f32 %v855, %v903
      %v905 = vpop.f32.mrf.mxu0
      %906 = vdwg.mxu0
      %907 = vst [vmem:[%s571] sm:$0xff] %v881
      %908 = vst [vmem:[%s571 + $0x8] sm:$0xff] %v899
      %909 = vst [vmem:[%s571 + $0x10] sm:$0xff] %v883
      %910 = vst [vmem:[%s571 + $0x18] sm:$0xff] %v901
      %911 = vst [vmem:[%s571 + $0x20] sm:$0x3] %v886
      %912 = vst [vmem:[%s571 + $0x28] sm:$0x3] %v904
      %p913 = scmp.lt.s32.totalorder %s29, 1
      %s914 = scalar_select %p913, %s29, 1
      %s915 = smul.addr %s914, 4
      %s916 = smul.addr %s915, 4
      %s917 = scalar_lea.vmem %s15, %s916
      %p918 = scmp.lt.s32.totalorder %s29, 1
      %s919 = scalar_select %p918, %s29, 1
      %s920 = smul.addr %s919, 2
      %s921 = scalar_lea.vmem %s16, %s920
      %p922 = scmp.lt.s32.totalorder %s29, 1
      %s923 = scalar_select %p922, %s29, 1
      %s924 = smul.addr %s923, 6
      %s925 = smul.addr %s924, 8
      %s926 = scalar_lea.vmem %s17, %s925
      // Predicated region
      $region81: #{residual_forward.2} parent=79 // pred_check
        %p927 = pneg %p367
      $region82: #{residual_forward.2} parent=79 // pred_check_branch
        %929 = sbr.rel (%p927) target = $region84
      $region83: #{residual_forward.2} parent=79 // pred_region
        _
      $region84: #{residual_forward.2} parent=79 // pred_fallthru
        _
      // Predicated region
      $region85: #{residual_forward.2} parent=79 // pred_check
        %p930 = pneg %p393
      $region86: #{residual_forward.2} parent=79 // pred_check_branch
        %932 = sbr.rel (%p930) target = $region88
      $region87: #{residual_forward.2} parent=79 // pred_region
        _
      $region88: #{residual_forward.2} parent=79 // pred_fallthru
        _
      // Predicated region
      $region89: #{residual_forward.2} parent=79 // pred_check
        %p933 = pneg %p419
      $region90: #{residual_forward.2} parent=79 // pred_check_branch
        %935 = sbr.rel (%p933) target = $region92
      $region91: #{residual_forward.2} parent=79 // pred_region
        _
      $region92: #{residual_forward.2} parent=79 // pred_fallthru
        _
    $region80: #{residual_forward.2} parent=5 // pred_fallthru
      _
    %p936 = scmp.le.s32.totalorder 2, %s24
    // Predicated region
    $region93: #{residual_forward.2} parent=5 // pred_check
      %p937 = pneg %p936
    $region94: #{residual_forward.2} parent=5 // pred_check_branch
      %939 = sbr.rel (%p937) target = $region96
    $region95: #{residual_forward.2} parent=5 // pred_region
      %s940 = ssub.s32 %s24, 2
      // Predicated region
      $region97: #{residual_forward.2} parent=95 // pred_check
        %p941 = pneg %p373
      $region98: #{residual_forward.2} parent=95 // pred_check_branch
        %943 = sbr.rel (%p941) target = $region100
      $region99: #{residual_forward.2} parent=95 // pred_region
        %p944 = scmp.lt.s32.totalorder %s30, 1
        %s945 = scalar_select %p944, %s30, 1
        %s946 = smul.addr %s945, 4
        %s947 = smul.addr %s946, 4
        %s948 = scalar_lea.vmem %s15, %s947
      $region100: #{residual_forward.2} parent=95 // pred_fallthru
        _
      // Predicated region
      $region101: #{residual_forward.2} parent=95 // pred_check
        %p949 = pneg %p399
      $region102: #{residual_forward.2} parent=95 // pred_check_branch
        %951 = sbr.rel (%p949) target = $region104
      $region103: #{residual_forward.2} parent=95 // pred_region
        %p952 = scmp.lt.s32.totalorder %s30, 1
        %s953 = scalar_select %p952, %s30, 1
        %s954 = smul.addr %s953, 2
        %s955 = scalar_lea.vmem %s16, %s954
      $region104: #{residual_forward.2} parent=95 // pred_fallthru
        _
      // Predicated region
      $region105: #{residual_forward.2} parent=95 // pred_check
        %p956 = pneg %p425
      $region106: #{residual_forward.2} parent=95 // pred_check_branch
        %958 = sbr.rel (%p956) target = $region108
      $region107: #{residual_forward.2} parent=95 // pred_region
        %p959 = scmp.lt.s32.totalorder %s30, 1
        %s960 = scalar_select %p959, %s30, 1
        %s961 = smul.addr %s960, 6
        %s962 = smul.addr %s961, 8
        %s963 = scalar_lea.vmem %s17, %s962
      $region108: #{residual_forward.2} parent=95 // pred_fallthru
        _
    $region96: #{residual_forward.2} parent=5 // pred_fallthru
      _
  $region6: #{residual_forward.2} parent=0 // loop_footer
    %s28 = sadd.s32 1, %s24
  $region7: #{residual_forward.2} parent=0 // loop_footer_branch
    %23 = sbr.rel target = $region3
  $region8: #{residual_forward.2} parent=0 // loop_exit
    _

// kernel: residual_forward.3
$region0: #{residual_forward.3}
  #allocation0 [shape = 'u32[]', space=smem, size = 0x4, offset = 0x4, fixed_abs, tag = 'smem constant byte address 0x4 - core index']
  #allocation1 [shape = 'u32[72,128]{1,0:T(1,128)}', space=vmem, size = 0x9000, scoped, tag = 'internal scratch']
  %s0 = inlined_call_operand.vmem [shape: bf16[2,81,256], index: 0, kind: input, shape index: {}]
  %s1 = inlined_call_operand.vmem [shape: bf16[9,81], index: 1, kind: input, shape index: {}]
  %s2 = inlined_call_operand.vmem [shape: bf16[2,18,640], index: 2, kind: input, shape index: {}]
  %s3 = inlined_call_operand.vmem [shape: bf16[4,2,18], index: 3, kind: input, shape index: {}]
  %s4 = inlined_call_operand.vmem [shape: bf16[640,256], index: 4, kind: input, shape index: {}]
  %s5 = inlined_call_operand.vmem [shape: f32[2,1], index: 5, kind: input, shape index: {}]
  %s6 = inlined_call_operand.vmem [shape: f32[2,1], index: 6, kind: input, shape index: {}]
  %s7 = inlined_call_operand.vmem [shape: bf16[9,2], index: 7, kind: input, shape index: {}]
  %s8 = inlined_call_operand.vmem [shape: f32[9,1], index: 8, kind: input, shape index: {}]
  %s9 = inlined_call_operand.vmem [shape: f32[9,1], index: 9, kind: input, shape index: {}]
  %s10 = inlined_call_operand.vmem [shape: bf16[18,9], index: 10, kind: input, shape index: {}]
  %s11 = inlined_call_operand.vmem [shape: f32[18,1], index: 11, kind: input, shape index: {}]
  %s12 = inlined_call_operand.vmem [shape: f32[2,18,256], index: 12, kind: input, shape index: {}]
  %s13 = inlined_call_operand.vmem [shape: f32[2,18,256], index: 13, kind: output, shape index: {}]
  %s14 = sld [smem:[#allocation0]]
  $region85: #{residual_forward.3} parent=0
    _
  %s16 = ssub.s32 1, %s14
  %s17 = scalar_select 0, %s16, %s14
  loop: start=0, step=1, limit=4
  $region2: #{residual_forward.3} parent=0 // loop_pre_header
    _
  $region3: #{residual_forward.3} parent=0 // loop_header
    %s19 = sphi 0, %s23
    %p20 = scmp.ge.s32.totalorder %s19, 4
    %s29 = sphi 0, %s31
    %s32 = sphi 0, %s29
    %s33 = sphi 0, %s32
    %s49 = sphi 0, %s33
    %s53 = sphi 0, %s53
    %s55 = sphi 0, %s53
    %s56 = sphi 0, %s55
    %s70 = sphi 0, %s56
    %s76 = sphi 0, %s78
    %s79 = sphi 0, %s76
    %s80 = sphi 0, %s79
    %s96 = sphi 0, %s80
    %s100 = sphi 0, %s100
    %s102 = sphi 0, %s100
    %s103 = sphi 0, %s102
    %s117 = sphi 0, %s103
    %s121 = sphi 0, %s121
    %s123 = sphi 0, %s121
    %s124 = sphi 0, %s123
    %s138 = sphi 0, %s124
    %s142 = sphi 0, %s142
    %s144 = sphi 0, %s142
    %s145 = sphi 0, %s144
    %s159 = sphi 0, %s145
    %s163 = sphi 0, %s163
    %s165 = sphi 0, %s163
    %s166 = sphi 0, %s165
    %s180 = sphi 0, %s166
    %s184 = sphi 0, %s184
    %s186 = sphi 0, %s184
    %s187 = sphi 0, %s186
    %s201 = sphi 0, %s187
    %s205 = sphi 0, %s205
    %s207 = sphi 0, %s205
    %s208 = sphi 0, %s207
    %s222 = sphi 0, %s208
    %s226 = sphi 0, %s226
    %s228 = sphi 0, %s226
    %s229 = sphi 0, %s228
    %s243 = sphi 0, %s229
    %s247 = sphi 0, %s247
    %s249 = sphi 0, %s247
    %s250 = sphi 0, %s249
    %s264 = sphi 0, %s250
    %s268 = sphi 0, %s268
    %s270 = sphi 0, %s268
    %s271 = sphi 0, %s270
    %s285 = sphi 0, %s271
    %s291 = sphi 0, %s293
    %s294 = sphi 0, %s291
    %s295 = sphi 0, %s294
    %s311 = sphi 0, %s295
    %s317 = sphi 0, %s319
    %s320 = sphi 0, %s317
    %s321 = sphi 0, %s320
    %s337 = sphi 0, %s321
  $region4: #{residual_forward.3} parent=0 // loop_header_branch
    %22 = sbr.rel (%p20) target = $region8
  $region5: #{residual_forward.3} parent=0 // loop_body
    %s24 = ssub.s32 %s19, 1
    %s25 = ssub.s32 %s19, 2
    %s26 = sadd.s32 %s19, 1
    %s27 = ssub.s32 %s19, %s26
    %p28 = scmp.eq.s32.totalorder %s27, 0
    %s30 = sadd.s32 %s29, 1
    %s31 = scalar_select %p28, %s29, %s30
    %p34 = pneg %p28
    %p35 = scmp.eq.s32.totalorder %s19, 1
    %p36 = por %p34, %p35
    %p37 = scmp.ne.s32.totalorder %s29, %s32
    %p38 = scmp.eq.s32.totalorder %s19, 0
    %p39 = por %p37, %p38
    %p40 = scmp.ne.s32.totalorder %s29, %s32
    %p41 = scmp.eq.s32.totalorder %s24, 1
    %p42 = por %p40, %p41
    %p43 = scmp.ne.s32.totalorder %s32, %s33
    %p44 = scmp.eq.s32.totalorder %s24, 0
    %p45 = por %p43, %p44
    %p46 = scmp.ne.s32.totalorder %s32, %s33
    %p47 = scmp.eq.s32.totalorder %s25, 1
    %p48 = por %p46, %p47
    %p50 = scmp.ne.s32.totalorder %s33, %s49
    %p51 = scmp.eq.s32.totalorder %s25, 0
    %p52 = por %p50, %p51
    %s54 = sadd.s32 %s53, 1
    %p57 = scmp.eq.s32.totalorder %s19, 1
    %p58 = scmp.ne.s32.totalorder %s53, %s55
    %p59 = scmp.eq.s32.totalorder %s19, 0
    %p60 = por %p58, %p59
    %p61 = scmp.ne.s32.totalorder %s53, %s55
    %p62 = scmp.eq.s32.totalorder %s24, 1
    %p63 = por %p61, %p62
    %p64 = scmp.ne.s32.totalorder %s55, %s56
    %p65 = scmp.eq.s32.totalorder %s24, 0
    %p66 = por %p64, %p65
    %p67 = scmp.ne.s32.totalorder %s55, %s56
    %p68 = scmp.eq.s32.totalorder %s25, 1
    %p69 = por %p67, %p68
    %p71 = scmp.ne.s32.totalorder %s56, %s70
    %p72 = scmp.eq.s32.totalorder %s25, 0
    %p73 = por %p71, %p72
    %s74 = ssub.s32 %s19, %s26
    %p75 = scmp.eq.s32.totalorder %s74, 0
    %s77 = sadd.s32 %s76, 1
    %s78 = scalar_select %p75, %s76, %s77
    %p81 = pneg %p75
    %p82 = scmp.eq.s32.totalorder %s19, 1
    %p83 = por %p81, %p82
    %p84 = scmp.ne.s32.totalorder %s76, %s79
    %p85 = scmp.eq.s32.totalorder %s19, 0
    %p86 = por %p84, %p85
    %p87 = scmp.ne.s32.totalorder %s76, %s79
    %p88 = scmp.eq.s32.totalorder %s24, 1
    %p89 = por %p87, %p88
    %p90 = scmp.ne.s32.totalorder %s79, %s80
    %p91 = scmp.eq.s32.totalorder %s24, 0
    %p92 = por %p90, %p91
    %p93 = scmp.ne.s32.totalorder %s79, %s80
    %p94 = scmp.eq.s32.totalorder %s25, 1
    %p95 = por %p93, %p94
    %p97 = scmp.ne.s32.totalorder %s80, %s96
    %p98 = scmp.eq.s32.totalorder %s25, 0
    %p99 = por %p97, %p98
    %s101 = sadd.s32 %s100, 1
    %p104 = scmp.eq.s32.totalorder %s19, 1
    %p105 = scmp.ne.s32.totalorder %s100, %s102
    %p106 = scmp.eq.s32.totalorder %s19, 0
    %p107 = por %p105, %p106
    %p108 = scmp.ne.s32.totalorder %s100, %s102
    %p109 = scmp.eq.s32.totalorder %s24, 1
    %p110 = por %p108, %p109
    %p111 = scmp.ne.s32.totalorder %s102, %s103
    %p112 = scmp.eq.s32.totalorder %s24, 0
    %p113 = por %p111, %p112
    %p114 = scmp.ne.s32.totalorder %s102, %s103
    %p115 = scmp.eq.s32.totalorder %s25, 1
    %p116 = por %p114, %p115
    %p118 = scmp.ne.s32.totalorder %s103, %s117
    %p119 = scmp.eq.s32.totalorder %s25, 0
    %p120 = por %p118, %p119
    %s122 = sadd.s32 %s121, 1
    %p125 = scmp.eq.s32.totalorder %s19, 1
    %p126 = scmp.ne.s32.totalorder %s121, %s123
    %p127 = scmp.eq.s32.totalorder %s19, 0
    %p128 = por %p126, %p127
    %p129 = scmp.ne.s32.totalorder %s121, %s123
    %p130 = scmp.eq.s32.totalorder %s24, 1
    %p131 = por %p129, %p130
    %p132 = scmp.ne.s32.totalorder %s123, %s124
    %p133 = scmp.eq.s32.totalorder %s24, 0
    %p134 = por %p132, %p133
    %p135 = scmp.ne.s32.totalorder %s123, %s124
    %p136 = scmp.eq.s32.totalorder %s25, 1
    %p137 = por %p135, %p136
    %p139 = scmp.ne.s32.totalorder %s124, %s138
    %p140 = scmp.eq.s32.totalorder %s25, 0
    %p141 = por %p139, %p140
    %s143 = sadd.s32 %s142, 1
    %p146 = scmp.eq.s32.totalorder %s19, 1
    %p147 = scmp.ne.s32.totalorder %s142, %s144
    %p148 = scmp.eq.s32.totalorder %s19, 0
    %p149 = por %p147, %p148
    %p150 = scmp.ne.s32.totalorder %s142, %s144
    %p151 = scmp.eq.s32.totalorder %s24, 1
    %p152 = por %p150, %p151
    %p153 = scmp.ne.s32.totalorder %s144, %s145
    %p154 = scmp.eq.s32.totalorder %s24, 0
    %p155 = por %p153, %p154
    %p156 = scmp.ne.s32.totalorder %s144, %s145
    %p157 = scmp.eq.s32.totalorder %s25, 1
    %p158 = por %p156, %p157
    %p160 = scmp.ne.s32.totalorder %s145, %s159
    %p161 = scmp.eq.s32.totalorder %s25, 0
    %p162 = por %p160, %p161
    %s164 = sadd.s32 %s163, 1
    %p167 = scmp.eq.s32.totalorder %s19, 1
    %p168 = scmp.ne.s32.totalorder %s163, %s165
    %p169 = scmp.eq.s32.totalorder %s19, 0
    %p170 = por %p168, %p169
    %p171 = scmp.ne.s32.totalorder %s163, %s165
    %p172 = scmp.eq.s32.totalorder %s24, 1
    %p173 = por %p171, %p172
    %p174 = scmp.ne.s32.totalorder %s165, %s166
    %p175 = scmp.eq.s32.totalorder %s24, 0
    %p176 = por %p174, %p175
    %p177 = scmp.ne.s32.totalorder %s165, %s166
    %p178 = scmp.eq.s32.totalorder %s25, 1
    %p179 = por %p177, %p178
    %p181 = scmp.ne.s32.totalorder %s166, %s180
    %p182 = scmp.eq.s32.totalorder %s25, 0
    %p183 = por %p181, %p182
    %s185 = sadd.s32 %s184, 1
    %p188 = scmp.eq.s32.totalorder %s19, 1
    %p189 = scmp.ne.s32.totalorder %s184, %s186
    %p190 = scmp.eq.s32.totalorder %s19, 0
    %p191 = por %p189, %p190
    %p192 = scmp.ne.s32.totalorder %s184, %s186
    %p193 = scmp.eq.s32.totalorder %s24, 1
    %p194 = por %p192, %p193
    %p195 = scmp.ne.s32.totalorder %s186, %s187
    %p196 = scmp.eq.s32.totalorder %s24, 0
    %p197 = por %p195, %p196
    %p198 = scmp.ne.s32.totalorder %s186, %s187
    %p199 = scmp.eq.s32.totalorder %s25, 1
    %p200 = por %p198, %p199
    %p202 = scmp.ne.s32.totalorder %s187, %s201
    %p203 = scmp.eq.s32.totalorder %s25, 0
    %p204 = por %p202, %p203
    %s206 = sadd.s32 %s205, 1
    %p209 = scmp.eq.s32.totalorder %s19, 1
    %p210 = scmp.ne.s32.totalorder %s205, %s207
    %p211 = scmp.eq.s32.totalorder %s19, 0
    %p212 = por %p210, %p211
    %p213 = scmp.ne.s32.totalorder %s205, %s207
    %p214 = scmp.eq.s32.totalorder %s24, 1
    %p215 = por %p213, %p214
    %p216 = scmp.ne.s32.totalorder %s207, %s208
    %p217 = scmp.eq.s32.totalorder %s24, 0
    %p218 = por %p216, %p217
    %p219 = scmp.ne.s32.totalorder %s207, %s208
    %p220 = scmp.eq.s32.totalorder %s25, 1
    %p221 = por %p219, %p220
    %p223 = scmp.ne.s32.totalorder %s208, %s222
    %p224 = scmp.eq.s32.totalorder %s25, 0
    %p225 = por %p223, %p224
    %s227 = sadd.s32 %s226, 1
    %p230 = scmp.eq.s32.totalorder %s19, 1
    %p231 = scmp.ne.s32.totalorder %s226, %s228
    %p232 = scmp.eq.s32.totalorder %s19, 0
    %p233 = por %p231, %p232
    %p234 = scmp.ne.s32.totalorder %s226, %s228
    %p235 = scmp.eq.s32.totalorder %s24, 1
    %p236 = por %p234, %p235
    %p237 = scmp.ne.s32.totalorder %s228, %s229
    %p238 = scmp.eq.s32.totalorder %s24, 0
    %p239 = por %p237, %p238
    %p240 = scmp.ne.s32.totalorder %s228, %s229
    %p241 = scmp.eq.s32.totalorder %s25, 1
    %p242 = por %p240, %p241
    %p244 = scmp.ne.s32.totalorder %s229, %s243
    %p245 = scmp.eq.s32.totalorder %s25, 0
    %p246 = por %p244, %p245
    %s248 = sadd.s32 %s247, 1
    %p251 = scmp.eq.s32.totalorder %s19, 1
    %p252 = scmp.ne.s32.totalorder %s247, %s249
    %p253 = scmp.eq.s32.totalorder %s19, 0
    %p254 = por %p252, %p253
    %p255 = scmp.ne.s32.totalorder %s247, %s249
    %p256 = scmp.eq.s32.totalorder %s24, 1
    %p257 = por %p255, %p256
    %p258 = scmp.ne.s32.totalorder %s249, %s250
    %p259 = scmp.eq.s32.totalorder %s24, 0
    %p260 = por %p258, %p259
    %p261 = scmp.ne.s32.totalorder %s249, %s250
    %p262 = scmp.eq.s32.totalorder %s25, 1
    %p263 = por %p261, %p262
    %p265 = scmp.ne.s32.totalorder %s250, %s264
    %p266 = scmp.eq.s32.totalorder %s25, 0
    %p267 = por %p265, %p266
    %s269 = sadd.s32 %s268, 1
    %p272 = scmp.eq.s32.totalorder %s19, 1
    %p273 = scmp.ne.s32.totalorder %s268, %s270
    %p274 = scmp.eq.s32.totalorder %s19, 0
    %p275 = por %p273, %p274
    %p276 = scmp.ne.s32.totalorder %s268, %s270
    %p277 = scmp.eq.s32.totalorder %s24, 1
    %p278 = por %p276, %p277
    %p279 = scmp.ne.s32.totalorder %s270, %s271
    %p280 = scmp.eq.s32.totalorder %s24, 0
    %p281 = por %p279, %p280
    %p282 = scmp.ne.s32.totalorder %s270, %s271
    %p283 = scmp.eq.s32.totalorder %s25, 1
    %p284 = por %p282, %p283
    %p286 = scmp.ne.s32.totalorder %s271, %s285
    %p287 = scmp.eq.s32.totalorder %s25, 0
    %p288 = por %p286, %p287
    %s289 = ssub.s32 %s19, %s26
    %p290 = scmp.eq.s32.totalorder %s289, 0
    %s292 = sadd.s32 %s291, 1
    %s293 = scalar_select %p290, %s291, %s292
    %p296 = pneg %p290
    %p297 = scmp.eq.s32.totalorder %s19, 1
    %p298 = por %p296, %p297
    %p299 = scmp.ne.s32.totalorder %s291, %s294
    %p300 = scmp.eq.s32.totalorder %s19, 0
    %p301 = por %p299, %p300
    %p302 = scmp.ne.s32.totalorder %s291, %s294
    %p303 = scmp.eq.s32.totalorder %s24, 1
    %p304 = por %p302, %p303
    %p305 = scmp.ne.s32.totalorder %s294, %s295
    %p306 = scmp.eq.s32.totalorder %s24, 0
    %p307 = por %p305, %p306
    %p308 = scmp.ne.s32.totalorder %s294, %s295
    %p309 = scmp.eq.s32.totalorder %s25, 1
    %p310 = por %p308, %p309
    %p312 = scmp.ne.s32.totalorder %s295, %s311
    %p313 = scmp.eq.s32.totalorder %s25, 0
    %p314 = por %p312, %p313
    %s315 = ssub.s32 %s19, %s26
    %p316 = scmp.eq.s32.totalorder %s315, 0
    %s318 = sadd.s32 %s317, 1
    %s319 = scalar_select %p316, %s317, %s318
    %p322 = pneg %p316
    %p323 = scmp.eq.s32.totalorder %s19, 1
    %p324 = por %p322, %p323
    %p325 = scmp.ne.s32.totalorder %s317, %s320
    %p326 = scmp.eq.s32.totalorder %s19, 0
    %p327 = por %p325, %p326
    %p328 = scmp.ne.s32.totalorder %s317, %s320
    %p329 = scmp.eq.s32.totalorder %s24, 1
    %p330 = por %p328, %p329
    %p331 = scmp.ne.s32.totalorder %s320, %s321
    %p332 = scmp.eq.s32.totalorder %s24, 0
    %p333 = por %p331, %p332
    %p334 = scmp.ne.s32.totalorder %s320, %s321
    %p335 = scmp.eq.s32.totalorder %s25, 1
    %p336 = por %p334, %p335
    %p338 = scmp.ne.s32.totalorder %s321, %s337
    %p339 = scmp.eq.s32.totalorder %s25, 0
    %p340 = por %p338, %p339
    %p341 = scmp.le.s32.totalorder 1, %s19
    %p342 = scmp.lt.s32.totalorder %s19, 3
    %p343 = pnand %p341, %p342
    %p344 = pneg %p343
    // Predicated region
    $region9: #{residual_forward.3} parent=5 // pred_check
      _
    $region10: #{residual_forward.3} parent=5 // pred_check_branch
      %346 = sbr.rel (%p343) target = $region12
    $region11: #{residual_forward.3} parent=5 // pred_region
      %s347 = ssub.s32 %s19, 1
      // Predicated region
      $region13: #{residual_forward.3} parent=11 // pred_check
        %p348 = pneg %p66
      $region14: #{residual_forward.3} parent=11 // pred_check_branch
        %350 = sbr.rel (%p348) target = $region16
      $region15: #{residual_forward.3} parent=11 // pred_region
        _
      $region16: #{residual_forward.3} parent=11 // pred_fallthru
        _
      // Predicated region
      $region17: #{residual_forward.3} parent=11 // pred_check
        %p351 = pneg %p113
      $region18: #{residual_forward.3} parent=11 // pred_check_branch
        %353 = sbr.rel (%p351) target = $region20
      $region19: #{residual_forward.3} parent=11 // pred_region
        _
      $region20: #{residual_forward.3} parent=11 // pred_fallthru
        _
      // Predicated region
      $region21: #{residual_forward.3} parent=11 // pred_check
        %p354 = pneg %p134
      $region22: #{residual_forward.3} parent=11 // pred_check_branch
        %356 = sbr.rel (%p354) target = $region24
      $region23: #{residual_forward.3} parent=11 // pred_region
        _
      $region24: #{residual_forward.3} parent=11 // pred_fallthru
        _
      // Predicated region
      $region25: #{residual_forward.3} parent=11 // pred_check
        %p357 = pneg %p155
      $region26: #{residual_forward.3} parent=11 // pred_check_branch
        %359 = sbr.rel (%p357) target = $region28
      $region27: #{residual_forward.3} parent=11 // pred_region
        _
      $region28: #{residual_forward.3} parent=11 // pred_fallthru
        _
      // Predicated region
      $region29: #{residual_forward.3} parent=11 // pred_check
        %p360 = pneg %p176
      $region30: #{residual_forward.3} parent=11 // pred_check_branch
        %362 = sbr.rel (%p360) target = $region32
      $region31: #{residual_forward.3} parent=11 // pred_region
        _
      $region32: #{residual_forward.3} parent=11 // pred_fallthru
        _
      // Predicated region
      $region33: #{residual_forward.3} parent=11 // pred_check
        %p363 = pneg %p197
      $region34: #{residual_forward.3} parent=11 // pred_check_branch
        %365 = sbr.rel (%p363) target = $region36
      $region35: #{residual_forward.3} parent=11 // pred_region
        _
      $region36: #{residual_forward.3} parent=11 // pred_fallthru
        _
      // Predicated region
      $region37: #{residual_forward.3} parent=11 // pred_check
        %p366 = pneg %p218
      $region38: #{residual_forward.3} parent=11 // pred_check_branch
        %368 = sbr.rel (%p366) target = $region40
      $region39: #{residual_forward.3} parent=11 // pred_region
        _
      $region40: #{residual_forward.3} parent=11 // pred_fallthru
        _
      // Predicated region
      $region41: #{residual_forward.3} parent=11 // pred_check
        %p369 = pneg %p239
      $region42: #{residual_forward.3} parent=11 // pred_check_branch
        %371 = sbr.rel (%p369) target = $region44
      $region43: #{residual_forward.3} parent=11 // pred_region
        _
      $region44: #{residual_forward.3} parent=11 // pred_fallthru
        _
      // Predicated region
      $region45: #{residual_forward.3} parent=11 // pred_check
        %p372 = pneg %p260
      $region46: #{residual_forward.3} parent=11 // pred_check_branch
        %374 = sbr.rel (%p372) target = $region48
      $region47: #{residual_forward.3} parent=11 // pred_region
        _
      $region48: #{residual_forward.3} parent=11 // pred_fallthru
        _
      // Predicated region
      $region49: #{residual_forward.3} parent=11 // pred_check
        %p375 = pneg %p281
      $region50: #{residual_forward.3} parent=11 // pred_check_branch
        %377 = sbr.rel (%p375) target = $region52
      $region51: #{residual_forward.3} parent=11 // pred_region
        _
      $region52: #{residual_forward.3} parent=11 // pred_fallthru
        _
    $region12: #{residual_forward.3} parent=5 // pred_fallthru
      _
    %p378 = scmp.lt.s32.totalorder %s19, 2
    // Predicated region
    $region53: #{residual_forward.3} parent=5 // pred_check
      %p379 = pneg %p378
    $region54: #{residual_forward.3} parent=5 // pred_check_branch
      %381 = sbr.rel (%p379) target = $region56
    $region55: #{residual_forward.3} parent=5 // pred_region
      // Predicated region
      $region57: #{residual_forward.3} parent=55 // pred_check
        %p382 = pneg %p39
      $region58: #{residual_forward.3} parent=55 // pred_check_branch
        %384 = sbr.rel (%p382) target = $region60
      $region59: #{residual_forward.3} parent=55 // pred_region
        %p385 = scmp.lt.s32.totalorder %s19, 1
        %s386 = scalar_select %p385, %s19, 1
        %s387 = smul.addr %s386, 22
        %s388 = smul.addr %s387, 4
        %s389 = scalar_lea.vmem %s0, %s388
      $region60: #{residual_forward.3} parent=55 // pred_fallthru
        _
      // Predicated region
      $region61: #{residual_forward.3} parent=55 // pred_check
        %p390 = pneg %p86
      $region62: #{residual_forward.3} parent=55 // pred_check_branch
        %392 = sbr.rel (%p390) target = $region64
      $region63: #{residual_forward.3} parent=55 // pred_region
        %p393 = scmp.lt.s32.totalorder %s19, 1
        %s394 = scalar_select %p393, %s19, 1
        %s395 = smul.addr %s394, 15
        %s396 = smul.addr %s395, 4
        %s397 = scalar_lea.vmem %s2, %s396
      $region64: #{residual_forward.3} parent=55 // pred_fallthru
        _
      // Predicated region
      $region65: #{residual_forward.3} parent=55 // pred_check
        %p398 = pneg %p301
      $region66: #{residual_forward.3} parent=55 // pred_check_branch
        %400 = sbr.rel (%p398) target = $region68
      $region67: #{residual_forward.3} parent=55 // pred_region
        %p401 = scmp.lt.s32.totalorder %s19, 1
        %s402 = scalar_select %p401, %s19, 1
        %s403 = smul.addr %s402, 6
        %s404 = smul.addr %s403, 8
        %s405 = scalar_lea.vmem %s12, %s404
      $region68: #{residual_forward.3} parent=55 // pred_fallthru
        _
    $region56: #{residual_forward.3} parent=5 // pred_fallthru
      _
    %p406 = scmp.le.s32.totalorder 1, %s19
    %p407 = scmp.lt.s32.totalorder %s19, 3
    %p408 = pnand %p406, %p407
    %p409 = pneg %p408
    // Predicated region
    $region69: #{residual_forward.3} parent=5 // pred_check
      _
    $region70: #{residual_forward.3} parent=5 // pred_check_branch
      %411 = sbr.rel (%p408) target = $region72
    $region71: #{residual_forward.3} parent=5 // pred_region
      %s412 = ssub.s32 %s19, 1
      %p413 = scmp.lt.s32.totalorder %s24, 1
      %s414 = scalar_select %p413, %s24, 1
      %s415 = smul.addr %s414, 22
      %s416 = smul.addr %s415, 4
      %s417 = scalar_lea.vmem %s0, %s416
      %p418 = pneg %p45
      %p419 = pneg %p42
      %p420 = pneg %p66
      %p421 = pneg %p63
      %p422 = scmp.lt.s32.totalorder %s24, 1
      %s423 = scalar_select %p422, %s24, 1
      %s424 = smul.addr %s423, 15
      %s425 = smul.addr %s424, 4
      %s426 = scalar_lea.vmem %s2, %s425
      %p427 = pneg %p92
      %p428 = pneg %p89
      %p429 = pneg %p113
      %p430 = pneg %p110
      %p431 = pneg %p134
      %p432 = pneg %p131
      %p433 = pneg %p155
      %p434 = pneg %p152
      %p435 = pneg %p176
      %p436 = pneg %p173
      %p437 = pneg %p197
      %p438 = pneg %p194
      %p439 = pneg %p218
      %p440 = pneg %p215
      %p441 = pneg %p239
      %p442 = pneg %p236
      %p443 = pneg %p260
      %p444 = pneg %p257
      %p445 = pneg %p281
      %p446 = pneg %p278
      %p447 = scmp.lt.s32.totalorder %s24, 1
      %s448 = scalar_select %p447, %s24, 1
      %s449 = smul.addr %s448, 6
      %s450 = smul.addr %s449, 8
      %s451 = scalar_lea.vmem %s12, %s450
      %p452 = pneg %p307
      %p453 = pneg %p304
      %p454 = pneg %p333
      %p455 = pneg %p330
      %p456 = scmp.lt.s32.totalorder %s24, 1
      %s457 = scalar_select %p456, %s24, 1
      %s458 = smul.addr %s457, 6
      %s459 = smul.addr %s458, 8
      %s460 = scalar_lea.vmem %s13, %s459
      %p461 = scmp.lt.s32.totalorder %s24, 1
      %s462 = scalar_select %p461, %s24, 1
      %s463 = smul.addr %s462, 22
      %s464 = smul.addr %s463, 4
      %s465 = scalar_lea.vmem %s0, %s464
      %p466 = scmp.lt.s32.totalorder %s24, 1
      %s467 = scalar_select %p466, %s24, 1
      %s468 = smul.addr %s467, 15
      %s469 = smul.addr %s468, 4
      %s470 = scalar_lea.vmem %s2, %s469
      %p471 = scmp.lt.s32.totalorder %s24, 1
      %s472 = scalar_select %p471, %s24, 1
      %s473 = smul.addr %s472, 6
      %s474 = smul.addr %s473, 8
      %s475 = scalar_lea.vmem %s12, %s474
      %p476 = scmp.lt.s32.totalorder %s24, 1
      %s477 = scalar_select %p476, %s24, 1
      %s478 = smul.addr %s477, 6
      %s479 = smul.addr %s478, 8
      %s480 = scalar_lea.vmem %s13, %s479
      %v482 = vld [vmem:[%s1] sm:$0xf]
      %v483 = vld [vmem:[%s1 + $0x4] sm:$0x1]
      %v484 = vld [vmem:[%s465] sm:$0xff]
      %v485 = vld [vmem:[%s465 + $0x8] sm:$0xff]
      %v486 = vld [vmem:[%s465 + $0x10] sm:$0xff]
      %v487 = vld [vmem:[%s465 + $0x18] sm:$0xff]
      %v488 = vld [vmem:[%s465 + $0x20] sm:$0xff]
      %v489 = vld [vmem:[%s465 + $0x28] sm:$0xff]
      %v490 = vld [vmem:[%s465 + $0x30] sm:$0xff]
      %v491 = vld [vmem:[%s465 + $0x38] sm:$0xff]
      %v492 = vld [vmem:[%s465 + $0x40] sm:$0xff]
      %v493 = vld [vmem:[%s465 + $0x48] sm:$0xff]
      %v494 = vld [vmem:[%s465 + $0x50] sm:$0x11]
      %v495 = vld [vmem:[%s3] sm:$0x1]
      %v496 = vld [vmem:[%s470] sm:$0xff]
      %v497 = vld [vmem:[%s470 + $0x14] sm:$0xff]
      %v498 = vld [vmem:[%s470 + $0x28] sm:$0x11]
      %v502 = vunpack.c.l.b16 %v496
      %v503 = vunpack.c.h.b16 %v496
      %v504 = vunpack.c.l.b16 %v497
      %v505 = vunpack.c.h.b16 %v497
      %v506 = vunpack.c.l.b16 %v498
      %v507 = vunpack.c.h.b16 %v498
      %v508 = vpack.c.b16 %v504, %v502
      %v509 = vpack.c.b16 %v505, %v503
      %v510 = vpack.c.b16 %v506, %v506
      %v511 = vpack.c.b16 %v507, %v507
      %vm514 = vcmask 146432
      %v516 = vsel %vm514, %v495, 0
      %vm518 = vcmask 1040384
      %v520 = vsel %vm518, %v510, 0
      %v523 = vsel %vm518, %v511, 0
      %525 = vmatpush.bf16.msra.mxu0 0
      %526 = vmatpush.bf16.msra.mxu0 0
      %527 = vmatpush.bf16.msra.mxu0 0
      %528 = vmatpush.bf16.msra.mxu0 0
      %529 = vmatpush.bf16.msra.mxu0 0
      %530 = vmatpush.bf16.msra.mxu0 0
      %531 = vmatpush.bf16.msra.mxu0 %v520
      %532 = vmatpush.bf16.msra.mxu0 %v508
      %533 = vmatmul.bf16.gmra.mxu0 %v516
      %v534 = vpop.f32.mrf.mxu0
      %v535 = vadd.f32 0.0, %v534
      %v536 = vpop.f32.mrf.mxu0
      %537 = vdwg.mxu0
      %538 = vmatpush.bf16.msra.mxu0 0
      %539 = vmatpush.bf16.msra.mxu0 0
      %540 = vmatpush.bf16.msra.mxu0 0
      %541 = vmatpush.bf16.msra.mxu0 0
      %542 = vmatpush.bf16.msra.mxu0 0
      %543 = vmatpush.bf16.msra.mxu0 0
      %544 = vmatpush.bf16.msra.mxu0 %v523
      %545 = vmatpush.bf16.msra.mxu0 %v509
      %546 = vmatmul.bf16.gmra.mxu0 %v516
      %v547 = vpop.f32.mrf.mxu0
      %v548 = vadd.f32 0.0, %v547
      %v549 = vpop.f32.mrf.mxu0
      %550 = vdwg.mxu0
      %s551 = scalar_lea.vmem %s3, 1
      %v552 = vld [vmem:[%s551] sm:$0x1]
      %v553 = vld [vmem:[%s470 + $0x8] sm:$0xf]
      %v554 = vld [vmem:[%s470 + $0x1c] sm:$0xf]
      %v555 = vld [vmem:[%s470 + $0x30] sm:$0x1]
      %v559 = vunpack.c.l.b16 %v553
      %v560 = vunpack.c.l.b16 %v554
      %v561 = vunpack.c.l.b16 %v555
      %v562 = vpack.c.b16 %v560, %v559
      %v563 = vpack.c.b16 %v561, %v561
      %v566 = vsel %vm514, %v552, 0
      %v569 = vsel %vm518, %v563, 0
      %571 = vmatpush.bf16.msra.mxu0 0
      %572 = vmatpush.bf16.msra.mxu0 0
      %573 = vmatpush.bf16.msra.mxu0 0
      %574 = vmatpush.bf16.msra.mxu0 0
      %575 = vmatpush.bf16.msra.mxu0 0
      %576 = vmatpush.bf16.msra.mxu0 0
      %577 = vmatpush.bf16.msra.mxu0 %v569
      %578 = vmatpush.bf16.msra.mxu0 %v562
      %579 = vmatmul.bf16.gmra.mxu0 %v566
      %v580 = vpop.f32.mrf.mxu0
      %v581 = vadd.f32 0.0, %v580
      %v582 = vpop.f32.mrf.mxu0
      %583 = vdwg.mxu0
      %s584 = scalar_lea.vmem %s3, 2
      %v585 = vld [vmem:[%s584] sm:$0x1]
      %v586 = vld [vmem:[%s470 + $0xc] sm:$0xf]
      %v587 = vld [vmem:[%s470 + $0x20] sm:$0xf]
      %v588 = vld [vmem:[%s470 + $0x34] sm:$0x1]
      %v592 = vunpack.c.l.b16 %v586
      %v593 = vunpack.c.l.b16 %v587
      %v594 = vunpack.c.l.b16 %v588
      %v595 = vpack.c.b16 %v593, %v592
      %v596 = vpack.c.b16 %v594, %v594
      %v599 = vsel %vm514, %v585, 0
      %v602 = vsel %vm518, %v596, 0
      %604 = vmatpush.bf16.msra.mxu0 0
      %605 = vmatpush.bf16.msra.mxu0 0
      %606 = vmatpush.bf16.msra.mxu0 0
      %607 = vmatpush.bf16.msra.mxu0 0
      %608 = vmatpush.bf16.msra.mxu0 0
      %609 = vmatpush.bf16.msra.mxu0 0
      %610 = vmatpush.bf16.msra.mxu0 %v602
      %611 = vmatpush.bf16.msra.mxu0 %v595
      %612 = vmatmul.bf16.gmra.mxu0 %v599
      %v613 = vpop.f32.mrf.mxu0
      %v614 = vadd.f32 0.0, %v613
      %v615 = vpop.f32.mrf.mxu0
      %616 = vdwg.mxu0
      %s617 = scalar_lea.vmem %s3, 3
      %v618 = vld [vmem:[%s617] sm:$0x1]
      %v619 = vld [vmem:[%s470 + $0x10] sm:$0xf]
      %v620 = vld [vmem:[%s470 + $0x24] sm:$0xf]
      %v621 = vld [vmem:[%s470 + $0x38] sm:$0x1]
      %v625 = vunpack.c.l.b16 %v619
      %v626 = vunpack.c.l.b16 %v620
      %v627 = vunpack.c.l.b16 %v621
      %v628 = vpack.c.b16 %v626, %v625
      %v629 = vpack.c.b16 %v627, %v627
      %v632 = vsel %vm514, %v618, 0
      %v635 = vsel %vm518, %v629, 0
      %637 = vmatpush.bf16.msra.mxu0 0
      %638 = vmatpush.bf16.msra.mxu0 0
      %639 = vmatpush.bf16.msra.mxu0 0
      %640 = vmatpush.bf16.msra.mxu0 0
      %641 = vmatpush.bf16.msra.mxu0 0
      %642 = vmatpush.bf16.msra.mxu0 0
      %643 = vmatpush.bf16.msra.mxu0 %v635
      %644 = vmatpush.bf16.msra.mxu0 %v628
      %645 = vmatmul.bf16.gmra.mxu0 %v632
      %v646 = vpop.f32.mrf.mxu0
      %v647 = vadd.f32 0.0, %v646
      %v648 = vpop.f32.mrf.mxu0
      %649 = vdwg.mxu0
      %v650 = vpack.c.bf16 %v535, %v535
      %v651 = vpack.c.bf16 %v548, %v548
      %v652 = vpack.c.bf16 %v581, %v581
      %v653 = vpack.c.bf16 %v614, %v614
      %v654 = vpack.c.bf16 %v647, %v647
      %v655 = vld [vmem:[%s4] sm:$0xff]
      %v656 = vld [vmem:[%s4 + $0x8] sm:$0xff]
      %v657 = vld [vmem:[%s4 + $0x10] sm:$0xff]
      %v658 = vld [vmem:[%s4 + $0x18] sm:$0xff]
      %v659 = vld [vmem:[%s4 + $0x20] sm:$0xff]
      %v660 = vld [vmem:[%s4 + $0x28] sm:$0xff]
      %v661 = vld [vmem:[%s4 + $0x30] sm:$0xff]
      %v662 = vld [vmem:[%s4 + $0x38] sm:$0xff]
      %v663 = vld [vmem:[%s4 + $0x40] sm:$0xff]
      %v664 = vld [vmem:[%s4 + $0x48] sm:$0xff]
      %v665 = vld [vmem:[%s4 + $0x50] sm:$0xff]
      %v666 = vld [vmem:[%s4 + $0x58] sm:$0xff]
      %v667 = vld [vmem:[%s4 + $0x60] sm:$0xff]
      %v668 = vld [vmem:[%s4 + $0x68] sm:$0xff]
      %v669 = vld [vmem:[%s4 + $0x70] sm:$0xff]
      %v670 = vld [vmem:[%s4 + $0x78] sm:$0xff]
      %v671 = vld [vmem:[%s4 + $0x80] sm:$0xff]
      %v672 = vld [vmem:[%s4 + $0x88] sm:$0xff]
      %v673 = vld [vmem:[%s4 + $0x90] sm:$0xff]
      %v674 = vld [vmem:[%s4 + $0x98] sm:$0xff]
      %v675 = vld [vmem:[%s4 + $0xa0] sm:$0xff]
      %v676 = vld [vmem:[%s4 + $0xa8] sm:$0xff]
      %v677 = vld [vmem:[%s4 + $0xb0] sm:$0xff]
      %v678 = vld [vmem:[%s4 + $0xb8] sm:$0xff]
      %v679 = vld [vmem:[%s4 + $0xc0] sm:$0xff]
      %v680 = vld [vmem:[%s4 + $0xc8] sm:$0xff]
      %v681 = vld [vmem:[%s4 + $0xd0] sm:$0xff]
      %v682 = vld [vmem:[%s4 + $0xd8] sm:$0xff]
      %v683 = vld [vmem:[%s4 + $0xe0] sm:$0xff]
      %v684 = vld [vmem:[%s4 + $0xe8] sm:$0xff]
      %v685 = vld [vmem:[%s4 + $0xf0] sm:$0xff]
      %v686 = vld [vmem:[%s4 + $0xf8] sm:$0xff]
      %v687 = vld [vmem:[%s4 + $0x100] sm:$0xff]
      %v688 = vld [vmem:[%s4 + $0x108] sm:$0xff]
      %v689 = vld [vmem:[%s4 + $0x110] sm:$0xff]
      %v690 = vld [vmem:[%s4 + $0x118] sm:$0xff]
      %v691 = vld [vmem:[%s4 + $0x120] sm:$0xff]
      %v692 = vld [vmem:[%s4 + $0x128] sm:$0xff]
      %v693 = vld [vmem:[%s4 + $0x130] sm:$0xff]
      %v694 = vld [vmem:[%s4 + $0x138] sm:$0xff]
      %v695 = vld [vmem:[%s4 + $0x140] sm:$0xff]
      %v696 = vld [vmem:[%s4 + $0x148] sm:$0xff]
      %v697 = vld [vmem:[%s4 + $0x150] sm:$0xff]
      %v698 = vld [vmem:[%s4 + $0x158] sm:$0xff]
      %v699 = vld [vmem:[%s4 + $0x160] sm:$0xff]
      %v700 = vld [vmem:[%s4 + $0x168] sm:$0xff]
      %v701 = vld [vmem:[%s4 + $0x170] sm:$0xff]
      %v702 = vld [vmem:[%s4 + $0x178] sm:$0xff]
      %v703 = vld [vmem:[%s4 + $0x180] sm:$0xff]
      %v704 = vld [vmem:[%s4 + $0x188] sm:$0xff]
      %v705 = vld [vmem:[%s4 + $0x190] sm:$0xff]
      %v706 = vld [vmem:[%s4 + $0x198] sm:$0xff]
      %v707 = vld [vmem:[%s4 + $0x1a0] sm:$0xff]
      %v708 = vld [vmem:[%s4 + $0x1a8] sm:$0xff]
      %v709 = vld [vmem:[%s4 + $0x1b0] sm:$0xff]
      %v710 = vld [vmem:[%s4 + $0x1b8] sm:$0xff]
      %v711 = vld [vmem:[%s4 + $0x1c0] sm:$0xff]
      %v712 = vld [vmem:[%s4 + $0x1c8] sm:$0xff]
      %v713 = vld [vmem:[%s4 + $0x1d0] sm:$0xff]
      %v714 = vld [vmem:[%s4 + $0x1d8] sm:$0xff]
      %v715 = vld [vmem:[%s4 + $0x1e0] sm:$0xff]
      %v716 = vld [vmem:[%s4 + $0x1e8] sm:$0xff]
      %v717 = vld [vmem:[%s4 + $0x1f0] sm:$0xff]
      %v718 = vld [vmem:[%s4 + $0x1f8] sm:$0xff]
      %v719 = vld [vmem:[%s4 + $0x200] sm:$0xff]
      %v720 = vld [vmem:[%s4 + $0x208] sm:$0xff]
      %v721 = vld [vmem:[%s4 + $0x210] sm:$0xff]
      %v722 = vld [vmem:[%s4 + $0x218] sm:$0xff]
      %v723 = vld [vmem:[%s4 + $0x220] sm:$0xff]
      %v724 = vld [vmem:[%s4 + $0x228] sm:$0xff]
      %v725 = vld [vmem:[%s4 + $0x230] sm:$0xff]
      %v726 = vld [vmem:[%s4 + $0x238] sm:$0xff]
      %v727 = vld [vmem:[%s4 + $0x240] sm:$0xff]
      %v728 = vld [vmem:[%s4 + $0x248] sm:$0xff]
      %v729 = vld [vmem:[%s4 + $0x250] sm:$0xff]
      %v730 = vld [vmem:[%s4 + $0x258] sm:$0xff]
      %v731 = vld [vmem:[%s4 + $0x260] sm:$0xff]
      %v732 = vld [vmem:[%s4 + $0x268] sm:$0xff]
      %v733 = vld [vmem:[%s4 + $0x270] sm:$0xff]
      %v734 = vld [vmem:[%s4 + $0x278] sm:$0xff]
      %v815 = vunpack.c.l.b16 %v655
      %v816 = vunpack.c.h.b16 %v655
      %v817 = vunpack.c.l.b16 %v656
      %v818 = vunpack.c.h.b16 %v656
      %v819 = vunpack.c.l.b16 %v657
      %v820 = vunpack.c.h.b16 %v657
      %v821 = vunpack.c.l.b16 %v658
      %v822 = vunpack.c.h.b16 %v658
      %v823 = vunpack.c.l.b16 %v659
      %v824 = vunpack.c.h.b16 %v659
      %v825 = vunpack.c.l.b16 %v660
      %v826 = vunpack.c.h.b16 %v660
      %v827 = vunpack.c.l.b16 %v661
      %v828 = vunpack.c.h.b16 %v661
      %v829 = vunpack.c.l.b16 %v662
      %v830 = vunpack.c.h.b16 %v662
      %v831 = vunpack.c.l.b16 %v663
      %v832 = vunpack.c.h.b16 %v663
      %v833 = vunpack.c.l.b16 %v664
      %v834 = vunpack.c.h.b16 %v664
      %v835 = vunpack.c.l.b16 %v665
      %v836 = vunpack.c.h.b16 %v665
      %v837 = vunpack.c.l.b16 %v666
      %v838 = vunpack.c.h.b16 %v666
      %v839 = vunpack.c.l.b16 %v667
      %v840 = vunpack.c.h.b16 %v667
      %v841 = vunpack.c.l.b16 %v668
      %v842 = vunpack.c.h.b16 %v668
      %v843 = vunpack.c.l.b16 %v669
      %v844 = vunpack.c.h.b16 %v669
      %v845 = vunpack.c.l.b16 %v670
      %v846 = vunpack.c.h.b16 %v670
      %v847 = vunpack.c.l.b16 %v671
      %v848 = vunpack.c.h.b16 %v671
      %v849 = vunpack.c.l.b16 %v672
      %v850 = vunpack.c.h.b16 %v672
      %v851 = vunpack.c.l.b16 %v673
      %v852 = vunpack.c.h.b16 %v673
      %v853 = vunpack.c.l.b16 %v674
      %v854 = vunpack.c.h.b16 %v674
      %v855 = vunpack.c.l.b16 %v675
      %v856 = vunpack.c.h.b16 %v675
      %v857 = vunpack.c.l.b16 %v676
      %v858 = vunpack.c.h.b16 %v676
      %v859 = vunpack.c.l.b16 %v677
      %v860 = vunpack.c.h.b16 %v677
      %v861 = vunpack.c.l.b16 %v678
      %v862 = vunpack.c.h.b16 %v678
      %v863 = vunpack.c.l.b16 %v679
      %v864 = vunpack.c.h.b16 %v679
      %v865 = vunpack.c.l.b16 %v680
      %v866 = vunpack.c.h.b16 %v680
      %v867 = vunpack.c.l.b16 %v681
      %v868 = vunpack.c.h.b16 %v681
      %v869 = vunpack.c.l.b16 %v682
      %v870 = vunpack.c.h.b16 %v682
      %v871 = vunpack.c.l.b16 %v683
      %v872 = vunpack.c.h.b16 %v683
      %v873 = vunpack.c.l.b16 %v684
      %v874 = vunpack.c.h.b16 %v684
      %v875 = vunpack.c.l.b16 %v685
      %v876 = vunpack.c.h.b16 %v685
      %v877 = vunpack.c.l.b16 %v686
      %v878 = vunpack.c.h.b16 %v686
      %v879 = vunpack.c.l.b16 %v687
      %v880 = vunpack.c.h.b16 %v687
      %v881 = vunpack.c.l.b16 %v688
      %v882 = vunpack.c.h.b16 %v688
      %v883 = vunpack.c.l.b16 %v689
      %v884 = vunpack.c.h.b16 %v689
      %v885 = vunpack.c.l.b16 %v690
      %v886 = vunpack.c.h.b16 %v690
      %v887 = vunpack.c.l.b16 %v691
      %v888 = vunpack.c.h.b16 %v691
      %v889 = vunpack.c.l.b16 %v692
      %v890 = vunpack.c.h.b16 %v692
      %v891 = vunpack.c.l.b16 %v693
      %v892 = vunpack.c.h.b16 %v693
      %v893 = vunpack.c.l.b16 %v694
      %v894 = vunpack.c.h.b16 %v694
      %v895 = vunpack.c.l.b16 %v695
      %v896 = vunpack.c.h.b16 %v695
      %v897 = vunpack.c.l.b16 %v696
      %v898 = vunpack.c.h.b16 %v696
      %v899 = vunpack.c.l.b16 %v697
      %v900 = vunpack.c.h.b16 %v697
      %v901 = vunpack.c.l.b16 %v698
      %v902 = vunpack.c.h.b16 %v698
      %v903 = vunpack.c.l.b16 %v699
      %v904 = vunpack.c.h.b16 %v699
      %v905 = vunpack.c.l.b16 %v700
      %v906 = vunpack.c.h.b16 %v700
      %v907 = vunpack.c.l.b16 %v701
      %v908 = vunpack.c.h.b16 %v701
      %v909 = vunpack.c.l.b16 %v702
      %v910 = vunpack.c.h.b16 %v702
      %v911 = vunpack.c.l.b16 %v703
      %v912 = vunpack.c.h.b16 %v703
      %v913 = vunpack.c.l.b16 %v704
      %v914 = vunpack.c.h.b16 %v704
      %v915 = vunpack.c.l.b16 %v705
      %v916 = vunpack.c.h.b16 %v705
      %v917 = vunpack.c.l.b16 %v706
      %v918 = vunpack.c.h.b16 %v706
      %v919 = vunpack.c.l.b16 %v707
      %v920 = vunpack.c.h.b16 %v707
      %v921 = vunpack.c.l.b16 %v708
      %v922 = vunpack.c.h.b16 %v708
      %v923 = vunpack.c.l.b16 %v709
      %v924 = vunpack.c.h.b16 %v709
      %v925 = vunpack.c.l.b16 %v710
      %v926 = vunpack.c.h.b16 %v710
      %v927 = vunpack.c.l.b16 %v711
      %v928 = vunpack.c.h.b16 %v711
      %v929 = vunpack.c.l.b16 %v712
      %v930 = vunpack.c.h.b16 %v712
      %v931 = vunpack.c.l.b16 %v713
      %v932 = vunpack.c.h.b16 %v713
      %v933 = vunpack.c.l.b16 %v714
      %v934 = vunpack.c.h.b16 %v714
      %v935 = vunpack.c.l.b16 %v715
      %v936 = vunpack.c.h.b16 %v715
      %v937 = vunpack.c.l.b16 %v716
      %v938 = vunpack.c.h.b16 %v716
      %v939 = vunpack.c.l.b16 %v717
      %v940 = vunpack.c.h.b16 %v717
      %v941 = vunpack.c.l.b16 %v718
      %v942 = vunpack.c.h.b16 %v718
      %v943 = vunpack.c.l.b16 %v719
      %v944 = vunpack.c.h.b16 %v719
      %v945 = vunpack.c.l.b16 %v720
      %v946 = vunpack.c.h.b16 %v720
      %v947 = vunpack.c.l.b16 %v721
      %v948 = vunpack.c.h.b16 %v721
      %v949 = vunpack.c.l.b16 %v722
      %v950 = vunpack.c.h.b16 %v722
      %v951 = vunpack.c.l.b16 %v723
      %v952 = vunpack.c.h.b16 %v723
      %v953 = vunpack.c.l.b16 %v724
      %v954 = vunpack.c.h.b16 %v724
      %v955 = vunpack.c.l.b16 %v725
      %v956 = vunpack.c.h.b16 %v725
      %v957 = vunpack.c.l.b16 %v726
      %v958 = vunpack.c.h.b16 %v726
      %v959 = vunpack.c.l.b16 %v727
      %v960 = vunpack.c.h.b16 %v727
      %v961 = vunpack.c.l.b16 %v728
      %v962 = vunpack.c.h.b16 %v728
      %v963 = vunpack.c.l.b16 %v729
      %v964 = vunpack.c.h.b16 %v729
      %v965 = vunpack.c.l.b16 %v730
      %v966 = vunpack.c.h.b16 %v730
      %v967 = vunpack.c.l.b16 %v731
      %v968 = vunpack.c.h.b16 %v731
      %v969 = vunpack.c.l.b16 %v732
      %v970 = vunpack.c.h.b16 %v732
      %v971 = vunpack.c.l.b16 %v733
      %v972 = vunpack.c.h.b16 %v733
      %v973 = vunpack.c.l.b16 %v734
      %v974 = vunpack.c.h.b16 %v734
      %v975 = vpack.c.b16 %v817, %v815
      %v976 = vpack.c.b16 %v818, %v816
      %v977 = vpack.c.b16 %v821, %v819
      %v978 = vpack.c.b16 %v822, %v820
      %v979 = vpack.c.b16 %v825, %v823
      %v980 = vpack.c.b16 %v826, %v824
      %v981 = vpack.c.b16 %v829, %v827
      %v982 = vpack.c.b16 %v830, %v828
      %v983 = vpack.c.b16 %v833, %v831
      %v984 = vpack.c.b16 %v834, %v832
      %v985 = vpack.c.b16 %v837, %v835
      %v986 = vpack.c.b16 %v838, %v836
      %v987 = vpack.c.b16 %v841, %v839
      %v988 = vpack.c.b16 %v842, %v840
      %v989 = vpack.c.b16 %v845, %v843
      %v990 = vpack.c.b16 %v846, %v844
      %v991 = vpack.c.b16 %v849, %v847
      %v992 = vpack.c.b16 %v850, %v848
      %v993 = vpack.c.b16 %v853, %v851
      %v994 = vpack.c.b16 %v854, %v852
      %v995 = vpack.c.b16 %v857, %v855
      %v996 = vpack.c.b16 %v858, %v856
      %v997 = vpack.c.b16 %v861, %v859
      %v998 = vpack.c.b16 %v862, %v860
      %v999 = vpack.c.b16 %v865, %v863
      %v1000 = vpack.c.b16 %v866, %v864
      %v1001 = vpack.c.b16 %v869, %v867
      %v1002 = vpack.c.b16 %v870, %v868
      %v1003 = vpack.c.b16 %v873, %v871
      %v1004 = vpack.c.b16 %v874, %v872
      %v1005 = vpack.c.b16 %v877, %v875
      %v1006 = vpack.c.b16 %v878, %v876
      %v1007 = vpack.c.b16 %v881, %v879
      %v1008 = vpack.c.b16 %v882, %v880
      %v1009 = vpack.c.b16 %v885, %v883
      %v1010 = vpack.c.b16 %v886, %v884
      %v1011 = vpack.c.b16 %v889, %v887
      %v1012 = vpack.c.b16 %v890, %v888
      %v1013 = vpack.c.b16 %v893, %v891
      %v1014 = vpack.c.b16 %v894, %v892
      %v1015 = vpack.c.b16 %v897, %v895
      %v1016 = vpack.c.b16 %v898, %v896
      %v1017 = vpack.c.b16 %v901, %v899
      %v1018 = vpack.c.b16 %v902, %v900
      %v1019 = vpack.c.b16 %v905, %v903
      %v1020 = vpack.c.b16 %v906, %v904
      %v1021 = vpack.c.b16 %v909, %v907
      %v1022 = vpack.c.b16 %v910, %v908
      %v1023 = vpack.c.b16 %v913, %v911
      %v1024 = vpack.c.b16 %v914, %v912
      %v1025 = vpack.c.b16 %v917, %v915
      %v1026 = vpack.c.b16 %v918, %v916
      %v1027 = vpack.c.b16 %v921, %v919
      %v1028 = vpack.c.b16 %v922, %v920
      %v1029 = vpack.c.b16 %v925, %v923
      %v1030 = vpack.c.b16 %v926, %v924
      %v1031 = vpack.c.b16 %v929, %v927
      %v1032 = vpack.c.b16 %v930, %v928
      %v1033 = vpack.c.b16 %v933, %v931
      %v1034 = vpack.c.b16 %v934, %v932
      %v1035 = vpack.c.b16 %v937, %v935
      %v1036 = vpack.c.b16 %v938, %v936
      %v1037 = vpack.c.b16 %v941, %v939
      %v1038 = vpack.c.b16 %v942, %v940
      %v1039 = vpack.c.b16 %v945, %v943
      %v1040 = vpack.c.b16 %v946, %v944
      %v1041 = vpack.c.b16 %v949, %v947
      %v1042 = vpack.c.b16 %v950, %v948
      %v1043 = vpack.c.b16 %v953, %v951
      %v1044 = vpack.c.b16 %v954, %v952
      %v1045 = vpack.c.b16 %v957, %v955
      %v1046 = vpack.c.b16 %v958, %v956
      %v1047 = vpack.c.b16 %v961, %v959
      %v1048 = vpack.c.b16 %v962, %v960
      %v1049 = vpack.c.b16 %v965, %v963
      %v1050 = vpack.c.b16 %v966, %v964
      %v1051 = vpack.c.b16 %v969, %v967
      %v1052 = vpack.c.b16 %v970, %v968
      %v1053 = vpack.c.b16 %v973, %v971
      %v1054 = vpack.c.b16 %v974, %v972
      %1135 = vmatpush.bf16.msra.mxu0 %v989
      %1136 = vmatpush.bf16.msra.mxu0 %v987
      %1137 = vmatpush.bf16.msra.mxu0 %v985
      %1138 = vmatpush.bf16.msra.mxu0 %v983
      %1139 = vmatpush.bf16.msra.mxu0 %v981
      %1140 = vmatpush.bf16.msra.mxu0 %v979
      %1141 = vmatpush.bf16.msra.mxu0 %v977
      %1142 = vmatpush.bf16.msra.mxu0 %v975
      %1143 = vmatmul.bf16.gmra.mxu0 %v650
      %v1144 = vpop.f32.mrf.mxu0
      %v1145 = vadd.f32 0.0, %v1144
      %v1146 = vpop.f32.mrf.mxu0
      %1147 = vdwg.mxu0
      %1148 = vmatpush.bf16.msra.mxu0 %v1005
      %1149 = vmatpush.bf16.msra.mxu0 %v1003
      %1150 = vmatpush.bf16.msra.mxu0 %v1001
      %1151 = vmatpush.bf16.msra.mxu0 %v999
      %1152 = vmatpush.bf16.msra.mxu0 %v997
      %1153 = vmatpush.bf16.msra.mxu0 %v995
      %1154 = vmatpush.bf16.msra.mxu0 %v993
      %1155 = vmatpush.bf16.msra.mxu0 %v991
      %1156 = vmatmul.bf16.gmra.mxu0 %v651
      %v1157 = vpop.f32.mrf.mxu0
      %v1158 = vadd.f32 %v1145, %v1157
      %v1159 = vpop.f32.mrf.mxu0
      %1160 = vdwg.mxu0
      %1161 = vmatpush.bf16.msra.mxu0 %v1021
      %1162 = vmatpush.bf16.msra.mxu0 %v1019
      %1163 = vmatpush.bf16.msra.mxu0 %v1017
      %1164 = vmatpush.bf16.msra.mxu0 %v1015
      %1165 = vmatpush.bf16.msra.mxu0 %v1013
      %1166 = vmatpush.bf16.msra.mxu0 %v1011
      %1167 = vmatpush.bf16.msra.mxu0 %v1009
      %1168 = vmatpush.bf16.msra.mxu0 %v1007
      %1169 = vmatmul.bf16.gmra.mxu0 %v652
      %v1170 = vpop.f32.mrf.mxu0
      %v1171 = vadd.f32 %v1158, %v1170
      %v1172 = vpop.f32.mrf.mxu0
      %1173 = vdwg.mxu0
      %1174 = vmatpush.bf16.msra.mxu0 %v1037
      %1175 = vmatpush.bf16.msra.mxu0 %v1035
      %1176 = vmatpush.bf16.msra.mxu0 %v1033
      %1177 = vmatpush.bf16.msra.mxu0 %v1031
      %1178 = vmatpush.bf16.msra.mxu0 %v1029
      %1179 = vmatpush.bf16.msra.mxu0 %v1027
      %1180 = vmatpush.bf16.msra.mxu0 %v1025
      %1181 = vmatpush.bf16.msra.mxu0 %v1023
      %1182 = vmatmul.bf16.gmra.mxu0 %v653
      %v1183 = vpop.f32.mrf.mxu0
      %v1184 = vadd.f32 %v1171, %v1183
      %v1185 = vpop.f32.mrf.mxu0
      %1186 = vdwg.mxu0
      %1187 = vmatpush.bf16.msra.mxu0 %v1053
      %1188 = vmatpush.bf16.msra.mxu0 %v1051
      %1189 = vmatpush.bf16.msra.mxu0 %v1049
      %1190 = vmatpush.bf16.msra.mxu0 %v1047
      %1191 = vmatpush.bf16.msra.mxu0 %v1045
      %1192 = vmatpush.bf16.msra.mxu0 %v1043
      %1193 = vmatpush.bf16.msra.mxu0 %v1041
      %1194 = vmatpush.bf16.msra.mxu0 %v1039
      %1195 = vmatmul.bf16.gmra.mxu0 %v654
      %v1196 = vpop.f32.mrf.mxu0
      %v1197 = vadd.f32 %v1184, %v1196
      %v1198 = vpop.f32.mrf.mxu0
      %1199 = vdwg.mxu0
      %1200 = vmatpush.bf16.msra.mxu0 %v990
      %1201 = vmatpush.bf16.msra.mxu0 %v988
      %1202 = vmatpush.bf16.msra.mxu0 %v986
      %1203 = vmatpush.bf16.msra.mxu0 %v984
      %1204 = vmatpush.bf16.msra.mxu0 %v982
      %1205 = vmatpush.bf16.msra.mxu0 %v980
      %1206 = vmatpush.bf16.msra.mxu0 %v978
      %1207 = vmatpush.bf16.msra.mxu0 %v976
      %1208 = vmatmul.bf16.gmra.mxu0 %v650
      %v1209 = vpop.f32.mrf.mxu0
      %v1210 = vadd.f32 0.0, %v1209
      %v1211 = vpop.f32.mrf.mxu0
      %1212 = vdwg.mxu0
      %1213 = vmatpush.bf16.msra.mxu0 %v1006
      %1214 = vmatpush.bf16.msra.mxu0 %v1004
      %1215 = vmatpush.bf16.msra.mxu0 %v1002
      %1216 = vmatpush.bf16.msra.mxu0 %v1000
      %1217 = vmatpush.bf16.msra.mxu0 %v998
      %1218 = vmatpush.bf16.msra.mxu0 %v996
      %1219 = vmatpush.bf16.msra.mxu0 %v994
      %1220 = vmatpush.bf16.msra.mxu0 %v992
      %1221 = vmatmul.bf16.gmra.mxu0 %v651
      %v1222 = vpop.f32.mrf.mxu0
      %v1223 = vadd.f32 %v1210, %v1222
      %v1224 = vpop.f32.mrf.mxu0
      %1225 = vdwg.mxu0
      %1226 = vmatpush.bf16.msra.mxu0 %v1022
      %1227 = vmatpush.bf16.msra.mxu0 %v1020
      %1228 = vmatpush.bf16.msra.mxu0 %v1018
      %1229 = vmatpush.bf16.msra.mxu0 %v1016
      %1230 = vmatpush.bf16.msra.mxu0 %v1014
      %1231 = vmatpush.bf16.msra.mxu0 %v1012
      %1232 = vmatpush.bf16.msra.mxu0 %v1010
      %1233 = vmatpush.bf16.msra.mxu0 %v1008
      %1234 = vmatmul.bf16.gmra.mxu0 %v652
      %v1235 = vpop.f32.mrf.mxu0
      %v1236 = vadd.f32 %v1223, %v1235
      %v1237 = vpop.f32.mrf.mxu0
      %1238 = vdwg.mxu0
      %1239 = vmatpush.bf16.msra.mxu0 %v1038
      %1240 = vmatpush.bf16.msra.mxu0 %v1036
      %1241 = vmatpush.bf16.msra.mxu0 %v1034
      %1242 = vmatpush.bf16.msra.mxu0 %v1032
      %1243 = vmatpush.bf16.msra.mxu0 %v1030
      %1244 = vmatpush.bf16.msra.mxu0 %v1028
      %1245 = vmatpush.bf16.msra.mxu0 %v1026
      %1246 = vmatpush.bf16.msra.mxu0 %v1024
      %1247 = vmatmul.bf16.gmra.mxu0 %v653
      %v1248 = vpop.f32.mrf.mxu0
      %v1249 = vadd.f32 %v1236, %v1248
      %v1250 = vpop.f32.mrf.mxu0
      %1251 = vdwg.mxu0
      %1252 = vmatpush.bf16.msra.mxu0 %v1054
      %1253 = vmatpush.bf16.msra.mxu0 %v1052
      %1254 = vmatpush.bf16.msra.mxu0 %v1050
      %1255 = vmatpush.bf16.msra.mxu0 %v1048
      %1256 = vmatpush.bf16.msra.mxu0 %v1046
      %1257 = vmatpush.bf16.msra.mxu0 %v1044
      %1258 = vmatpush.bf16.msra.mxu0 %v1042
      %1259 = vmatpush.bf16.msra.mxu0 %v1040
      %1260 = vmatmul.bf16.gmra.mxu0 %v654
      %v1261 = vpop.f32.mrf.mxu0
      %v1262 = vadd.f32 %v1249, %v1261
      %v1263 = vpop.f32.mrf.mxu0
      %1264 = vdwg.mxu0
      %v1265 = vld [vmem:[%s5] sm:$0x3]
      %1267 = vset.pattern.permute.xlu0 0
      %1268 = vperm.xlu0 %1267, %v1265
      %v1269 = vpop.permute.xlu0 %1268
      %v1271 = vmul.f32 %v1197, %v1269
      %v1272 = vmul.f32 %v1262, %v1269
      %v1273 = vld [vmem:[%s6] sm:$0x3]
      %1275 = vset.pattern.permute.xlu0 0
      %1276 = vperm.xlu0 %1275, %v1273
      %v1277 = vpop.permute.xlu0 %1276
      %v1279 = vadd.f32 %v1271, %v1277
      %v1280 = vadd.f32 %v1272, %v1277
      %v1281 = vmax.f32 %v1279, 0.0
      %v1282 = vmax.f32 %v1280, 0.0
      %v1283 = vpack.c.bf16 %v1281, %v1281
      %v1284 = vpack.c.bf16 %v1282, %v1282
      %v1285 = vld [vmem:[%s7] sm:$0xf]
      %v1286 = vld [vmem:[%s7 + $0x4] sm:$0x1]
      %v1289 = vunpack.c.l.b16 %v1285
      %v1290 = vunpack.c.l.b16 %v1286
      %v1291 = vpack.c.b16 %v1290, %v1289
      %vm1292 = vcmask 15360
      %v1294 = vsel %vm1292, %v1291, 0
      %v1297 = vsel %vm518, %v1283, 0
      %v1300 = vsel %vm518, %v1284, 0
      %1302 = vmatpush.bf16.msra.mxu0 0
      %1303 = vmatpush.bf16.msra.mxu0 0
      %1304 = vmatpush.bf16.msra.mxu0 0
      %1305 = vmatpush.bf16.msra.mxu0 0
      %1306 = vmatpush.bf16.msra.mxu0 0
      %1307 = vmatpush.bf16.msra.mxu0 0
      %1308 = vmatpush.bf16.msra.mxu0 0
      %1309 = vmatpush.bf16.msra.mxu0 %v1297
      %1310 = vmatmul.bf16.gmra.mxu0 %v1294
      %v1311 = vpop.f32.mrf.mxu0
      %v1312 = vadd.f32 0.0, %v1311
      %v1313 = vpop.f32.mrf.mxu0
      %v1314 = vadd.f32 0.0, %v1313
      %1315 = vdwg.mxu0
      %1316 = vmatpush.bf16.msra.mxu0 0
      %1317 = vmatpush.bf16.msra.mxu0 0
      %1318 = vmatpush.bf16.msra.mxu0 0
      %1319 = vmatpush.bf16.msra.mxu0 0
      %1320 = vmatpush.bf16.msra.mxu0 0
      %1321 = vmatpush.bf16.msra.mxu0 0
      %1322 = vmatpush.bf16.msra.mxu0 0
      %1323 = vmatpush.bf16.msra.mxu0 %v1300
      %1324 = vmatmul.bf16.gmra.mxu0 %v1294
      %v1325 = vpop.f32.mrf.mxu0
      %v1326 = vadd.f32 0.0, %v1325
      %v1327 = vpop.f32.mrf.mxu0
      %v1328 = vadd.f32 0.0, %v1327
      %1329 = vdwg.mxu0
      %v1332 = vunpack.c.l.b16 %v482
      %v1333 = vunpack.c.l.b16 %v483
      %v1334 = vpack.c.b16 %v1333, %v1332
      %v1346 = vunpack.c.l.b16 %v484
      %v1347 = vunpack.c.h.b16 %v484
      %v1348 = vunpack.c.l.b16 %v485
      %v1349 = vunpack.c.h.b16 %v485
      %v1350 = vunpack.c.l.b16 %v486
      %v1351 = vunpack.c.h.b16 %v486
      %v1352 = vunpack.c.l.b16 %v487
      %v1353 = vunpack.c.h.b16 %v487
      %v1354 = vunpack.c.l.b16 %v488
      %v1355 = vunpack.c.h.b16 %v488
      %v1356 = vunpack.c.l.b16 %v489
      %v1357 = vunpack.c.h.b16 %v489
      %v1358 = vunpack.c.l.b16 %v490
      %v1359 = vunpack.c.h.b16 %v490
      %v1360 = vunpack.c.l.b16 %v491
      %v1361 = vunpack.c.h.b16 %v491
      %v1362 = vunpack.c.l.b16 %v492
      %v1363 = vunpack.c.h.b16 %v492
      %v1364 = vunpack.c.l.b16 %v493
      %v1365 = vunpack.c.h.b16 %v493
      %v1366 = vunpack.c.l.b16 %v494
      %v1367 = vunpack.c.h.b16 %v494
      %v1368 = vpack.c.b16 %v1348, %v1346
      %v1369 = vpack.c.b16 %v1349, %v1347
      %v1370 = vpack.c.b16 %v1352, %v1350
      %v1371 = vpack.c.b16 %v1353, %v1351
      %v1372 = vpack.c.b16 %v1356, %v1354
      %v1373 = vpack.c.b16 %v1357, %v1355
      %v1374 = vpack.c.b16 %v1360, %v1358
      %v1375 = vpack.c.b16 %v1361, %v1359
      %v1376 = vpack.c.b16 %v1364, %v1362
      %v1377 = vpack.c.b16 %v1365, %v1363
      %v1378 = vpack.c.b16 %v1366, %v1366
      %v1379 = vpack.c.b16 %v1367, %v1367
      %vm1390 = vcmask 662528
      %v1392 = vsel %vm1390, %v1334, 0
      %v1394 = vsel 0, 4294967295, 65535
      %v1395 = vsel %vm518, %v1394, 0
      %v1397 = vand.u32 %v1378, %v1395
      %v1400 = vand.u32 %v1379, %v1395
      %1402 = vmatpush.bf16.msra.mxu0 0
      %1403 = vmatpush.bf16.msra.mxu0 0
      %1404 = vmatpush.bf16.msra.mxu0 %v1397
      %1405 = vmatpush.bf16.msra.mxu0 %v1376
      %1406 = vmatpush.bf16.msra.mxu0 %v1374
      %1407 = vmatpush.bf16.msra.mxu0 %v1372
      %1408 = vmatpush.bf16.msra.mxu0 %v1370
      %1409 = vmatpush.bf16.msra.mxu0 %v1368
      %1410 = vmatmul.bf16.gmra.mxu0 %v1392
      %v1411 = vpop.f32.mrf.mxu0
      %v1412 = vadd.f32 %v1312, %v1411
      %v1413 = vpop.f32.mrf.mxu0
      %v1414 = vadd.f32 %v1314, %v1413
      %1415 = vdwg.mxu0
      %1416 = vmatpush.bf16.msra.mxu0 0
      %1417 = vmatpush.bf16.msra.mxu0 0
      %1418 = vmatpush.bf16.msra.mxu0 %v1400
      %1419 = vmatpush.bf16.msra.mxu0 %v1377
      %1420 = vmatpush.bf16.msra.mxu0 %v1375
      %1421 = vmatpush.bf16.msra.mxu0 %v1373
      %1422 = vmatpush.bf16.msra.mxu0 %v1371
      %1423 = vmatpush.bf16.msra.mxu0 %v1369
      %1424 = vmatmul.bf16.gmra.mxu0 %v1392
      %v1425 = vpop.f32.mrf.mxu0
      %v1426 = vadd.f32 %v1326, %v1425
      %v1427 = vpop.f32.mrf.mxu0
      %v1428 = vadd.f32 %v1328, %v1427
      %1429 = vdwg.mxu0
      %v1430 = vld [vmem:[%s8] sm:$0xff]
      %v1431 = vld [vmem:[%s8 + $0x8] sm:$0x1]
      %1433 = vset.pattern.permute.xlu0 0
      %1434 = vperm.xlu0 %1433, %v1430
      %v1435 = vpop.permute.xlu0 %1434
      %1438 = vset.pattern.permute.xlu0 0
      %1439 = vperm.xlu0 %1438, %v1431
      %v1440 = vpop.permute.xlu0 %1439
      %v1442 = vmul.f32 %v1412, %v1435
      %v1443 = vmul.f32 %v1426, %v1435
      %v1444 = vmul.f32 %v1414, %v1440
      %v1445 = vmul.f32 %v1428, %v1440
      %v1446 = vld [vmem:[%s9] sm:$0xff]
      %v1447 = vld [vmem:[%s9 + $0x8] sm:$0x1]
      %1449 = vset.pattern.permute.xlu0 0
      %1450 = vperm.xlu0 %1449, %v1446
      %v1451 = vpop.permute.xlu0 %1450
      %1454 = vset.pattern.permute.xlu0 0
      %1455 = vperm.xlu0 %1454, %v1447
      %v1456 = vpop.permute.xlu0 %1455
      %v1458 = vadd.f32 %v1442, %v1451
      %v1459 = vadd.f32 %v1443, %v1451
      %v1460 = vadd.f32 %v1444, %v1456
      %v1461 = vadd.f32 %v1445, %v1456
      %v1462 = vmax.f32 %v1458, 0.0
      %v1463 = vmax.f32 %v1459, 0.0
      %v1464 = vmax.f32 %v1460, 0.0
      %v1465 = vmax.f32 %v1461, 0.0
      %v1466 = vpack.c.bf16 %v1464, %v1462
      %v1467 = vpack.c.bf16 %v1465, %v1463
      %v1468 = vld [vmem:[%s10] sm:$0xf]
      %v1469 = vld [vmem:[%s10 + $0x4] sm:$0xf]
      %v1470 = vld [vmem:[%s10 + $0x8] sm:$0x1]
      %v1471 = vld [vmem:[%s11] sm:$0xff]
      %v1472 = vld [vmem:[%s11 + $0x8] sm:$0xff]
      %v1473 = vld [vmem:[%s11 + $0x10] sm:$0x3]
      %1475 = vset.pattern.permute.xlu0 0
      %1476 = vperm.xlu0 %1475, %v1471
      %v1477 = vpop.permute.xlu0 %1476
      %1480 = vset.pattern.permute.xlu0 0
      %1481 = vperm.xlu0 %1480, %v1472
      %v1482 = vpop.permute.xlu0 %1481
      %1485 = vset.pattern.permute.xlu0 0
      %1486 = vperm.xlu0 %1485, %v1473
      %v1487 = vpop.permute.xlu0 %1486
      %v1492 = vunpack.c.l.b16 %v1468
      %v1493 = vunpack.c.l.b16 %v1469
      %v1494 = vunpack.c.l.b16 %v1470
      %v1495 = vpack.c.b16 %v1493, %v1492
      %v1496 = vpack.c.b16 %v1494, %v1494
      %vm1497 = vcmask 72704
      %v1499 = vsel %vm1497, %v1495, 0
      %v1502 = vsel %vm1497, %v1496, 0
      %vm1504 = vcmask 1043456
      %vm1505 = vcmask 1044480
      %v1506 = vsel %vm1504, 4294967295, 65535
      %v1507 = vsel %vm1505, %v1506, 0
      %v1509 = vand.u32 %v1466, %v1507
      %v1512 = vand.u32 %v1467, %v1507
      %1514 = vmatpush.bf16.msra.mxu0 0
      %1515 = vmatpush.bf16.msra.mxu0 0
      %1516 = vmatpush.bf16.msra.mxu0 0
      %1517 = vmatpush.bf16.msra.mxu0 0
      %1518 = vmatpush.bf16.msra.mxu0 0
      %1519 = vmatpush.bf16.msra.mxu0 0
      %1520 = vmatpush.bf16.msra.mxu0 0
      %1521 = vmatpush.bf16.msra.mxu0 %v1509
      %1522 = vmatmul.bf16.gmra.mxu0 %v1499
      %v1523 = vpop.f32.mrf.mxu0
      %v1524 = vadd.f32 %v1477, %v1523
      %v1525 = vpop.f32.mrf.mxu0
      %v1526 = vadd.f32 %v1482, %v1525
      %1527 = vmatmul.bf16.gmra.mxu0 %v1502
      %v1528 = vpop.f32.mrf.mxu0
      %v1529 = vadd.f32 %v1487, %v1528
      %v1530 = vpop.f32.mrf.mxu0
      %1531 = vdwg.mxu0
      %1532 = vmatpush.bf16.msra.mxu0 0
      %1533 = vmatpush.bf16.msra.mxu0 0
      %1534 = vmatpush.bf16.msra.mxu0 0
      %1535 = vmatpush.bf16.msra.mxu0 0
      %1536 = vmatpush.bf16.msra.mxu0 0
      %1537 = vmatpush.bf16.msra.mxu0 0
      %1538 = vmatpush.bf16.msra.mxu0 0
      %1539 = vmatpush.bf16.msra.mxu0 %v1512
      %1540 = vmatmul.bf16.gmra.mxu0 %v1499
      %v1541 = vpop.f32.mrf.mxu0
      %v1542 = vadd.f32 %v1477, %v1541
      %v1543 = vpop.f32.mrf.mxu0
      %v1544 = vadd.f32 %v1482, %v1543
      %1545 = vmatmul.bf16.gmra.mxu0 %v1502
      %v1546 = vpop.f32.mrf.mxu0
      %v1547 = vadd.f32 %v1487, %v1546
      %v1548 = vpop.f32.mrf.mxu0
      %1549 = vdwg.mxu0
      %v1550 = vld [vmem:[%s475] sm:$0xff]
      %v1551 = vld [vmem:[%s475 + $0x8] sm:$0xff]
      %v1552 = vld [vmem:[%s475 + $0x10] sm:$0xff]
      %v1553 = vld [vmem:[%s475 + $0x18] sm:$0xff]
      %v1554 = vld [vmem:[%s475 + $0x20] sm:$0x3]
      %v1555 = vld [vmem:[%s475 + $0x28] sm:$0x3]
      %v1556 = vadd.f32 %v1524, %v1550
      %v1557 = vadd.f32 %v1542, %v1551
      %v1558 = vadd.f32 %v1526, %v1552
      %v1559 = vadd.f32 %v1544, %v1553
      %v1560 = vadd.f32 %v1529, %v1554
      %v1561 = vadd.f32 %v1547, %v1555
      %1562 = vst [vmem:[%s480] sm:$0xff] %v1556
      %1563 = vst [vmem:[%s480 + $0x8] sm:$0xff] %v1557
      %1564 = vst [vmem:[%s480 + $0x10] sm:$0xff] %v1558
      %1565 = vst [vmem:[%s480 + $0x18] sm:$0xff] %v1559
      %1566 = vst [vmem:[%s480 + $0x20] sm:$0x3] %v1560
      %1567 = vst [vmem:[%s480 + $0x28] sm:$0x3] %v1561
      %p1568 = scmp.lt.s32.totalorder %s24, 1
      %s1569 = scalar_select %p1568, %s24, 1
      %s1570 = smul.addr %s1569, 6
      %s1571 = smul.addr %s1570, 8
      %s1572 = scalar_lea.vmem %s13, %s1571
      // Predicated region
      $region73: #{residual_forward.3} parent=71 // pred_check
        %p1573 = pneg %p330
      $region74: #{residual_forward.3} parent=71 // pred_check_branch
        %1575 = sbr.rel (%p1573) target = $region76
      $region75: #{residual_forward.3} parent=71 // pred_region
        _
      $region76: #{residual_forward.3} parent=71 // pred_fallthru
        _
    $region72: #{residual_forward.3} parent=5 // pred_fallthru
      _
    %p1576 = scmp.le.s32.totalorder 2, %s19
    // Predicated region
    $region77: #{residual_forward.3} parent=5 // pred_check
      %p1577 = pneg %p1576
    $region78: #{residual_forward.3} parent=5 // pred_check_branch
      %1579 = sbr.rel (%p1577) target = $region80
    $region79: #{residual_forward.3} parent=5 // pred_region
      %s1580 = ssub.s32 %s19, 2
      // Predicated region
      $region81: #{residual_forward.3} parent=79 // pred_check
        %p1581 = pneg %p336
      $region82: #{residual_forward.3} parent=79 // pred_check_branch
        %1583 = sbr.rel (%p1581) target = $region84
      $region83: #{residual_forward.3} parent=79 // pred_region
        %p1584 = scmp.lt.s32.totalorder %s25, 1
        %s1585 = scalar_select %p1584, %s25, 1
        %s1586 = smul.addr %s1585, 6
        %s1587 = smul.addr %s1586, 8
        %s1588 = scalar_lea.vmem %s13, %s1587
      $region84: #{residual_forward.3} parent=79 // pred_fallthru
        _
    $region80: #{residual_forward.3} parent=5 // pred_fallthru
      _
  $region6: #{residual_forward.3} parent=0 // loop_footer
    %s23 = sadd.s32 1, %s19
  $region7: #{residual_forward.3} parent=0 // loop_footer_branch
    %18 = sbr.rel target = $region3
  $region8: #{residual_forward.3} parent=0 // loop_exit
    _

</llo_original>
